<compile_context>
chip_gen: v7x
topology: tpu7x:2x2x1
jax: 0.10.0
libtpu: 0.0.40
codegen_flags: <defaults>
</compile_context>

<pallas_src>
import functools

import jax
import jax.numpy as jnp
from jax.experimental import pallas as pl
from jax.experimental.pallas import tpu as pltpu


def _round_up(x, m):
    return (x + m - 1) // m * m


def _mlp_kernel(x_ref,
                w1, b1, w2, b2, w3, b3, w4, b4, w5, b5, w6, b6, w7, b7,
                o_ref, *, n_valid_out):
    """Fused MLP forward for one batch tile:
       6x (bf16 MXU matmul -> f32 bias + ReLU), final matmul + masked softmax."""
    h = x_ref[...]                                        # bf16 (TM, K0)

    for w_ref, b_ref in ((w1, b1), (w2, b2), (w3, b3),
                         (w4, b4), (w5, b5), (w6, b6)):
        acc = jnp.dot(h, w_ref[...], preferred_element_type=jnp.float32)
        h = jnp.maximum(acc + b_ref[...], 0.0).astype(jnp.bfloat16)

    logits = jnp.dot(h, w7[...], preferred_element_type=jnp.float32) + b7[...]

    # Mask padded output lanes so they do not contribute to the softmax.
    lane = jax.lax.broadcasted_iota(jnp.int32, logits.shape, dimension=1)
    logits = jnp.where(lane < n_valid_out, logits, -jnp.inf)

    m = jnp.max(logits, axis=-1, keepdims=True)
    e = jnp.exp(logits - m)
    denom = jnp.sum(e, axis=-1, keepdims=True)
    o_ref[...] = (e * pl.reciprocal(denom, approx=True)).astype(o_ref.dtype)


@jax.jit
def net_forward(x, params):
    """params: list of 7 (W, b) with W:(in,out) float32, b:(1,out) float32."""
    batch, n_in = x.shape
    n_out = params[-1][0].shape[1]

    dims = [n_in] + [w.shape[1] for w, _ in params]      # true layer widths
    dims_p = [_round_up(d, 128) for d in dims]           # lane-padded widths

    # Batch tiling: TM rows per grid step (MXU-friendly; fits small batches too).
    tm = _round_up(batch, 8) if batch <= 256 else 256
    batch_p = _round_up(batch, tm)
    grid = (batch_p // tm,)

    # Pad + cast inputs: bf16 feeds to the MXU, zero padding is exact.
    x_p = jnp.zeros((batch_p, dims_p[0]), jnp.bfloat16)
    x_p = x_p.at[:batch, :n_in].set(x.astype(jnp.bfloat16))

    flat_args = [x_p]
    in_specs = [pl.BlockSpec((tm, dims_p[0]), lambda i: (i, 0))]
    for k, (w, b) in enumerate(params):
        kin, kout = dims[k], dims[k + 1]
        pin, pout = dims_p[k], dims_p[k + 1]
        w_p = jnp.zeros((pin, pout), jnp.bfloat16).at[:kin, :kout].set(
            w.astype(jnp.bfloat16))
        b_p = jnp.zeros((1, pout), jnp.float32).at[:, :kout].set(
            b.astype(jnp.float32))
        flat_args += [w_p, b_p]
        # Constant index_map -> weights/biases resident in VMEM, DMA'd once.
        in_specs += [pl.BlockSpec((pin, pout), lambda i: (0, 0)),
                     pl.BlockSpec((1, pout), lambda i: (0, 0))]

    out_spec = pl.BlockSpec((tm, dims_p[-1]), lambda i: (i, 0))

    # Advisory cost estimate for XLA scheduling around the kernel.
    flops = 2 * batch_p * sum(dims_p[k] * dims_p[k + 1] for k in range(7))
    bytes_accessed = (sum(a.size * a.dtype.itemsize for a in flat_args)
                      + batch_p * dims_p[-1] * 4)
    cost = pl.CostEstimate(flops=flops,
                           transcendentals=batch_p * dims_p[-1],
                           bytes_accessed=bytes_accessed)

    # VMEM budget: resident weights/biases + double-buffered x/out tiles
    # + headroom for intermediate activations.
    w_bytes = sum(dims_p[k] * dims_p[k + 1] * 2 + dims_p[k + 1] * 4
                  for k in range(7))
    io_bytes = 2 * (tm * dims_p[0] * 2 + tm * dims_p[-1] * 4)
    act_bytes = 4 * tm * max(dims_p) * 4
    vmem_limit = int(min(max(2 * (w_bytes + io_bytes + act_bytes), 32 << 20),
                         100 << 20))
    # NOTE: for very large n_inputs (resident weights approaching VMEM capacity,
    # esp. v7x's 64 MiB), W2/W3 should move to HBM (memory_space=pl.ANY) with a
    # pltpu.emit_pipeline over their K dimension; not needed at these sizes.

    out_p = pl.pallas_call(
        functools.partial(_mlp_kernel, n_valid_out=n_out),
        out_shape=jax.ShapeDtypeStruct((batch_p, dims_p[-1]), jnp.float32),
        grid=grid,
        in_specs=in_specs,
        out_specs=out_spec,
        compiler_params=pltpu.CompilerParams(
            dimension_semantics=("parallel",),
            vmem_limit_bytes=vmem_limit),
        cost_estimate=cost,
    )(*flat_args)

    return out_p[:batch, :n_out]


def init_params(key, n_inputs, n_outputs):
    """Deterministic init mirroring the layer shapes of the PyTorch module."""
    sizes = [n_inputs,
             n_inputs * 60, n_inputs * 50, n_inputs * 40,
             n_inputs * 30, n_inputs * 20, n_inputs * 10,
             n_outputs]
    params = []
    for i in range(7):
        key, kw, kb = jax.random.split(key, 3)
        fan_in, fan_out = sizes[i], sizes[i + 1]
        bound = 1.0 / jnp.sqrt(jnp.float32(fan_in))   # PyTorch default Linear init
        w = jax.random.uniform(kw, (fan_in, fan_out), jnp.float32, -bound, bound)
        b = jax.random.uniform(kb, (1, fan_out), jnp.float32, -bound, bound)
        params.append((w, b))
    return params


def _reference_forward(x, params):
    """Pure-JAX reference with matching bf16-matmul / f32-accumulate precision."""
    h = x.astype(jnp.bfloat16)
    for i, (w, b) in enumerate(params):
        h = jnp.dot(h, w.astype(jnp.bfloat16),
                    preferred_element_type=jnp.float32) + b
        if i < 6:
            h = jnp.maximum(h, 0.0).astype(jnp.bfloat16)
    return jax.nn.softmax(h, axis=1)


if __name__ == "__main__":
    n_inputs, n_outputs, batch = 8, 4, 8

    key = jax.random.PRNGKey(0)
    key, kx = jax.random.split(key)
    x = jax.random.normal(kx, (batch, n_inputs), jnp.float32)
    params = init_params(key, n_inputs, n_outputs)

    out = jax.block_until_ready(net_forward(x, params))
    ref = _reference_forward(x, params)

    assert out.shape == (batch, n_outputs)
    assert jnp.allclose(out, ref, atol=3e-3, rtol=3e-3), \
        float(jnp.max(jnp.abs(out - ref)))
    assert jnp.allclose(jnp.sum(out, axis=1), 1.0, atol=2e-3)

    print("KERNEL_OK")
</pallas_src>

<mosaic_0001>
module attributes {stable_mosaic.version = 11 : i64} {
  func.func @_mlp_kernel(%arg0: i32, %arg1: memref<8x128xbf16, #tpu.memory_space<vmem>>, %arg2: memref<128x512xbf16, #tpu.memory_space<vmem>>, %arg3: memref<1x512xf32, #tpu.memory_space<vmem>>, %arg4: memref<512x512xbf16, #tpu.memory_space<vmem>>, %arg5: memref<1x512xf32, #tpu.memory_space<vmem>>, %arg6: memref<512x384xbf16, #tpu.memory_space<vmem>>, %arg7: memref<1x384xf32, #tpu.memory_space<vmem>>, %arg8: memref<384x256xbf16, #tpu.memory_space<vmem>>, %arg9: memref<1x256xf32, #tpu.memory_space<vmem>>, %arg10: memref<256x256xbf16, #tpu.memory_space<vmem>>, %arg11: memref<1x256xf32, #tpu.memory_space<vmem>>, %arg12: memref<256x128xbf16, #tpu.memory_space<vmem>>, %arg13: memref<1x128xf32, #tpu.memory_space<vmem>>, %arg14: memref<128x128xbf16, #tpu.memory_space<vmem>>, %arg15: memref<1x128xf32, #tpu.memory_space<vmem>>, %arg16: memref<8x128xf32, #tpu.memory_space<vmem>>) attributes {dimension_semantics = [#tpu.dimension_semantics<parallel>], iteration_bounds = array<i64: 1>, scalar_prefetch = 0 : i64, scratch_operands = 0 : i64, tpu.core_type = #tpu.core_type<tc>, window_params = [{transform_indices = @transform_0, window_bounds = array<i64: 8, 128>}, {pipeline_mode = #tpu.pipeline_mode<synchronous>, transform_indices = @transform_1, window_bounds = array<i64: 128, 512>}, {pipeline_mode = #tpu.pipeline_mode<synchronous>, transform_indices = @transform_2, window_bounds = array<i64: 1, 512>}, {pipeline_mode = #tpu.pipeline_mode<synchronous>, transform_indices = @transform_3, window_bounds = array<i64: 512, 512>}, {pipeline_mode = #tpu.pipeline_mode<synchronous>, transform_indices = @transform_4, window_bounds = array<i64: 1, 512>}, {pipeline_mode = #tpu.pipeline_mode<synchronous>, transform_indices = @transform_5, window_bounds = array<i64: 512, 384>}, {pipeline_mode = #tpu.pipeline_mode<synchronous>, transform_indices = @transform_6, window_bounds = array<i64: 1, 384>}, {pipeline_mode = #tpu.pipeline_mode<synchronous>, transform_indices = @transform_7, window_bounds = array<i64: 384, 256>}, {pipeline_mode = #tpu.pipeline_mode<synchronous>, transform_indices = @transform_8, window_bounds = array<i64: 1, 256>}, {pipeline_mode = #tpu.pipeline_mode<synchronous>, transform_indices = @transform_9, window_bounds = array<i64: 256, 256>}, {pipeline_mode = #tpu.pipeline_mode<synchronous>, transform_indices = @transform_10, window_bounds = array<i64: 1, 256>}, {pipeline_mode = #tpu.pipeline_mode<synchronous>, transform_indices = @transform_11, window_bounds = array<i64: 256, 128>}, {pipeline_mode = #tpu.pipeline_mode<synchronous>, transform_indices = @transform_12, window_bounds = array<i64: 1, 128>}, {pipeline_mode = #tpu.pipeline_mode<synchronous>, transform_indices = @transform_13, window_bounds = array<i64: 128, 128>}, {pipeline_mode = #tpu.pipeline_mode<synchronous>, transform_indices = @transform_14, window_bounds = array<i64: 1, 128>}, {transform_indices = @transform_15, window_bounds = array<i64: 8, 128>}]} {
    %c0 = arith.constant 0 : index
    %c0_0 = arith.constant 0 : index
    %0 = vector.load %arg1[%c0, %c0_0] : memref<8x128xbf16, #tpu.memory_space<vmem>>, vector<8x128xbf16>
    %c0_1 = arith.constant 0 : index
    %c0_2 = arith.constant 0 : index
    %1 = vector.load %arg2[%c0_1, %c0_2] : memref<128x512xbf16, #tpu.memory_space<vmem>>, vector<128x512xbf16>
    %cst = arith.constant dense<0.000000e+00> : vector<8x512xf32>
    %2 = tpu.matmul %0, %1, %cst {dimension_numbers = #tpu.dot_dimension_numbers<[1], [0], [0], [1], [0, 0, 1, 1], [], []>} : vector<8x128xbf16>, vector<128x512xbf16>, vector<8x512xf32> -> vector<8x512xf32>
    %c0_3 = arith.constant 0 : index
    %c0_4 = arith.constant 0 : index
    %3 = vector.load %arg3[%c0_3, %c0_4] : memref<1x512xf32, #tpu.memory_space<vmem>>, vector<1x512xf32>
    %4 = vector.broadcast %3 : vector<1x512xf32> to vector<8x512xf32>
    %5 = arith.addf %2, %4 : vector<8x512xf32>
    %cst_5 = arith.constant 0.000000e+00 : f32
    %6 = vector.broadcast %cst_5 : f32 to vector<8x512xf32>
    %7 = arith.maximumf %5, %6 : vector<8x512xf32>
    %8 = arith.truncf %7 : vector<8x512xf32> to vector<8x512xbf16>
    %c0_6 = arith.constant 0 : index
    %c0_7 = arith.constant 0 : index
    %9 = vector.load %arg4[%c0_6, %c0_7] : memref<512x512xbf16, #tpu.memory_space<vmem>>, vector<512x512xbf16>
    %cst_8 = arith.constant dense<0.000000e+00> : vector<8x512xf32>
    %10 = tpu.matmul %8, %9, %cst_8 {dimension_numbers = #tpu.dot_dimension_numbers<[1], [0], [0], [1], [0, 0, 1, 1], [], []>} : vector<8x512xbf16>, vector<512x512xbf16>, vector<8x512xf32> -> vector<8x512xf32>
    %c0_9 = arith.constant 0 : index
    %c0_10 = arith.constant 0 : index
    %11 = vector.load %arg5[%c0_9, %c0_10] : memref<1x512xf32, #tpu.memory_space<vmem>>, vector<1x512xf32>
    %12 = vector.broadcast %11 : vector<1x512xf32> to vector<8x512xf32>
    %13 = arith.addf %10, %12 : vector<8x512xf32>
    %cst_11 = arith.constant 0.000000e+00 : f32
    %14 = vector.broadcast %cst_11 : f32 to vector<8x512xf32>
    %15 = arith.maximumf %13, %14 : vector<8x512xf32>
    %16 = arith.truncf %15 : vector<8x512xf32> to vector<8x512xbf16>
    %c0_12 = arith.constant 0 : index
    %c0_13 = arith.constant 0 : index
    %17 = vector.load %arg6[%c0_12, %c0_13] : memref<512x384xbf16, #tpu.memory_space<vmem>>, vector<512x384xbf16>
    %cst_14 = arith.constant dense<0.000000e+00> : vector<8x384xf32>
    %18 = tpu.matmul %16, %17, %cst_14 {dimension_numbers = #tpu.dot_dimension_numbers<[1], [0], [0], [1], [0, 0, 1, 1], [], []>} : vector<8x512xbf16>, vector<512x384xbf16>, vector<8x384xf32> -> vector<8x384xf32>
    %c0_15 = arith.constant 0 : index
    %c0_16 = arith.constant 0 : index
    %19 = vector.load %arg7[%c0_15, %c0_16] : memref<1x384xf32, #tpu.memory_space<vmem>>, vector<1x384xf32>
    %20 = vector.broadcast %19 : vector<1x384xf32> to vector<8x384xf32>
    %21 = arith.addf %18, %20 : vector<8x384xf32>
    %cst_17 = arith.constant 0.000000e+00 : f32
    %22 = vector.broadcast %cst_17 : f32 to vector<8x384xf32>
    %23 = arith.maximumf %21, %22 : vector<8x384xf32>
    %24 = arith.truncf %23 : vector<8x384xf32> to vector<8x384xbf16>
    %c0_18 = arith.constant 0 : index
    %c0_19 = arith.constant 0 : index
    %25 = vector.load %arg8[%c0_18, %c0_19] : memref<384x256xbf16, #tpu.memory_space<vmem>>, vector<384x256xbf16>
    %cst_20 = arith.constant dense<0.000000e+00> : vector<8x256xf32>
    %26 = tpu.matmul %24, %25, %cst_20 {dimension_numbers = #tpu.dot_dimension_numbers<[1], [0], [0], [1], [0, 0, 1, 1], [], []>} : vector<8x384xbf16>, vector<384x256xbf16>, vector<8x256xf32> -> vector<8x256xf32>
    %c0_21 = arith.constant 0 : index
    %c0_22 = arith.constant 0 : index
    %27 = vector.load %arg9[%c0_21, %c0_22] : memref<1x256xf32, #tpu.memory_space<vmem>>, vector<1x256xf32>
    %28 = vector.broadcast %27 : vector<1x256xf32> to vector<8x256xf32>
    %29 = arith.addf %26, %28 : vector<8x256xf32>
    %cst_23 = arith.constant 0.000000e+00 : f32
    %30 = vector.broadcast %cst_23 : f32 to vector<8x256xf32>
    %31 = arith.maximumf %29, %30 : vector<8x256xf32>
    %32 = arith.truncf %31 : vector<8x256xf32> to vector<8x256xbf16>
    %c0_24 = arith.constant 0 : index
    %c0_25 = arith.constant 0 : index
    %33 = vector.load %arg10[%c0_24, %c0_25] : memref<256x256xbf16, #tpu.memory_space<vmem>>, vector<256x256xbf16>
    %cst_26 = arith.constant dense<0.000000e+00> : vector<8x256xf32>
    %34 = tpu.matmul %32, %33, %cst_26 {dimension_numbers = #tpu.dot_dimension_numbers<[1], [0], [0], [1], [0, 0, 1, 1], [], []>} : vector<8x256xbf16>, vector<256x256xbf16>, vector<8x256xf32> -> vector<8x256xf32>
    %c0_27 = arith.constant 0 : index
    %c0_28 = arith.constant 0 : index
    %35 = vector.load %arg11[%c0_27, %c0_28] : memref<1x256xf32, #tpu.memory_space<vmem>>, vector<1x256xf32>
    %36 = vector.broadcast %35 : vector<1x256xf32> to vector<8x256xf32>
    %37 = arith.addf %34, %36 : vector<8x256xf32>
    %cst_29 = arith.constant 0.000000e+00 : f32
    %38 = vector.broadcast %cst_29 : f32 to vector<8x256xf32>
    %39 = arith.maximumf %37, %38 : vector<8x256xf32>
    %40 = arith.truncf %39 : vector<8x256xf32> to vector<8x256xbf16>
    %c0_30 = arith.constant 0 : index
    %c0_31 = arith.constant 0 : index
    %41 = vector.load %arg12[%c0_30, %c0_31] : memref<256x128xbf16, #tpu.memory_space<vmem>>, vector<256x128xbf16>
    %cst_32 = arith.constant dense<0.000000e+00> : vector<8x128xf32>
    %42 = tpu.matmul %40, %41, %cst_32 {dimension_numbers = #tpu.dot_dimension_numbers<[1], [0], [0], [1], [0, 0, 1, 1], [], []>} : vector<8x256xbf16>, vector<256x128xbf16>, vector<8x128xf32> -> vector<8x128xf32>
    %c0_33 = arith.constant 0 : index
    %c0_34 = arith.constant 0 : index
    %43 = vector.load %arg13[%c0_33, %c0_34] : memref<1x128xf32, #tpu.memory_space<vmem>>, vector<1x128xf32>
    %44 = vector.broadcast %43 : vector<1x128xf32> to vector<8x128xf32>
    %45 = arith.addf %42, %44 : vector<8x128xf32>
    %cst_35 = arith.constant 0.000000e+00 : f32
    %46 = vector.broadcast %cst_35 : f32 to vector<8x128xf32>
    %47 = arith.maximumf %45, %46 : vector<8x128xf32>
    %48 = arith.truncf %47 : vector<8x128xf32> to vector<8x128xbf16>
    %c0_36 = arith.constant 0 : index
    %c0_37 = arith.constant 0 : index
    %49 = vector.load %arg14[%c0_36, %c0_37] : memref<128x128xbf16, #tpu.memory_space<vmem>>, vector<128x128xbf16>
    %cst_38 = arith.constant dense<0.000000e+00> : vector<8x128xf32>
    %50 = tpu.matmul %48, %49, %cst_38 {dimension_numbers = #tpu.dot_dimension_numbers<[1], [0], [0], [1], [0, 0, 1, 1], [], []>} : vector<8x128xbf16>, vector<128x128xbf16>, vector<8x128xf32> -> vector<8x128xf32>
    %c0_39 = arith.constant 0 : index
    %c0_40 = arith.constant 0 : index
    %51 = vector.load %arg15[%c0_39, %c0_40] : memref<1x128xf32, #tpu.memory_space<vmem>>, vector<1x128xf32>
    %52 = vector.broadcast %51 : vector<1x128xf32> to vector<8x128xf32>
    %53 = arith.addf %50, %52 : vector<8x128xf32>
    %54 = tpu.iota {dimensions = array<i32: 1>} : vector<8x128xi32>
    %c4_i32 = arith.constant 4 : i32
    %55 = vector.broadcast %c4_i32 : i32 to vector<8x128xi32>
    %56 = arith.cmpi slt, %54, %55 : vector<8x128xi32>
    %cst_41 = arith.constant 0xFF800000 : f32
    %57 = vector.broadcast %cst_41 : f32 to vector<8x128xf32>
    %58 = arith.select %56, %53, %57 : vector<8x128xi1>, vector<8x128xf32>
    %cst_42 = arith.constant dense<0xFF800000> : vector<8xf32>
    %59 = vector.multi_reduction <maximumf>, %58, %cst_42 [1] : vector<8x128xf32> to vector<8xf32>
    %60 = vector.shape_cast %59 : vector<8xf32> to vector<8x1xf32>
    %61 = vector.broadcast %60 : vector<8x1xf32> to vector<8x128xf32>
    %62 = arith.subf %58, %61 : vector<8x128xf32>
    %63 = math.exp %62 : vector<8x128xf32>
    %cst_43 = arith.constant dense<0.000000e+00> : vector<8xf32>
    %64 = vector.multi_reduction <add>, %63, %cst_43 [1] : vector<8x128xf32> to vector<8xf32>
    %65 = vector.shape_cast %64 : vector<8xf32> to vector<8x1xf32>
    %66 = tpu.reciprocal %65 {approx = true} : vector<8x1xf32> -> vector<8x1xf32>
    %67 = vector.broadcast %66 : vector<8x1xf32> to vector<8x128xf32>
    %68 = arith.mulf %63, %67 : vector<8x128xf32>
    %c0_44 = arith.constant 0 : index
    %c0_45 = arith.constant 0 : index
    %69 = vector.load %arg16[%c0_44, %c0_45] : memref<8x128xf32, #tpu.memory_space<vmem>>, vector<8x128xf32>
    tpu.vector_store %arg16[%c0_44, %c0_45], %68 {strides = array<i32>} : memref<8x128xf32, #tpu.memory_space<vmem>>, vector<8x128xf32>,
    return
  }
  func.func @transform_0(%arg0: i32) -> (i32, i32) {
    %c0_i32 = arith.constant 0 : i32
    %c0_i32_0 = arith.constant 0 : i32
    return %arg0, %c0_i32 : i32, i32
  }
  func.func @transform_1(%arg0: i32) -> (i32, i32) {
    %c0_i32 = arith.constant 0 : i32
    %c0_i32_0 = arith.constant 0 : i32
    %c0_i32_1 = arith.constant 0 : i32
    return %c0_i32, %c0_i32_0 : i32, i32
  }
  func.func @transform_2(%arg0: i32) -> (i32, i32) {
    %c0_i32 = arith.constant 0 : i32
    %c0_i32_0 = arith.constant 0 : i32
    %c0_i32_1 = arith.constant 0 : i32
    return %c0_i32, %c0_i32_0 : i32, i32
  }
  func.func @transform_3(%arg0: i32) -> (i32, i32) {
    %c0_i32 = arith.constant 0 : i32
    %c0_i32_0 = arith.constant 0 : i32
    %c0_i32_1 = arith.constant 0 : i32
    return %c0_i32, %c0_i32_0 : i32, i32
  }
  func.func @transform_4(%arg0: i32) -> (i32, i32) {
    %c0_i32 = arith.constant 0 : i32
    %c0_i32_0 = arith.constant 0 : i32
    %c0_i32_1 = arith.constant 0 : i32
    return %c0_i32, %c0_i32_0 : i32, i32
  }
  func.func @transform_5(%arg0: i32) -> (i32, i32) {
    %c0_i32 = arith.constant 0 : i32
    %c0_i32_0 = arith.constant 0 : i32
    %c0_i32_1 = arith.constant 0 : i32
    return %c0_i32, %c0_i32_0 : i32, i32
  }
  func.func @transform_6(%arg0: i32) -> (i32, i32) {
    %c0_i32 = arith.constant 0 : i32
    %c0_i32_0 = arith.constant 0 : i32
    %c0_i32_1 = arith.constant 0 : i32
    return %c0_i32, %c0_i32_0 : i32, i32
  }
  func.func @transform_7(%arg0: i32) -> (i32, i32) {
    %c0_i32 = arith.constant 0 : i32
    %c0_i32_0 = arith.constant 0 : i32
    %c0_i32_1 = arith.constant 0 : i32
    return %c0_i32, %c0_i32_0 : i32, i32
  }
  func.func @transform_8(%arg0: i32) -> (i32, i32) {
    %c0_i32 = arith.constant 0 : i32
    %c0_i32_0 = arith.constant 0 : i32
    %c0_i32_1 = arith.constant 0 : i32
    return %c0_i32, %c0_i32_0 : i32, i32
  }
  func.func @transform_9(%arg0: i32) -> (i32, i32) {
    %c0_i32 = arith.constant 0 : i32
    %c0_i32_0 = arith.constant 0 : i32
    %c0_i32_1 = arith.constant 0 : i32
    return %c0_i32, %c0_i32_0 : i32, i32
  }
  func.func @transform_10(%arg0: i32) -> (i32, i32) {
    %c0_i32 = arith.constant 0 : i32
    %c0_i32_0 = arith.constant 0 : i32
    %c0_i32_1 = arith.constant 0 : i32
    return %c0_i32, %c0_i32_0 : i32, i32
  }
  func.func @transform_11(%arg0: i32) -> (i32, i32) {
    %c0_i32 = arith.constant 0 : i32
    %c0_i32_0 = arith.constant 0 : i32
    %c0_i32_1 = arith.constant 0 : i32
    return %c0_i32, %c0_i32_0 : i32, i32
  }
  func.func @transform_12(%arg0: i32) -> (i32, i32) {
    %c0_i32 = arith.constant 0 : i32
    %c0_i32_0 = arith.constant 0 : i32
    %c0_i32_1 = arith.constant 0 : i32
    return %c0_i32, %c0_i32_0 : i32, i32
  }
  func.func @transform_13(%arg0: i32) -> (i32, i32) {
    %c0_i32 = arith.constant 0 : i32
    %c0_i32_0 = arith.constant 0 : i32
    %c0_i32_1 = arith.constant 0 : i32
    return %c0_i32, %c0_i32_0 : i32, i32
  }
  func.func @transform_14(%arg0: i32) -> (i32, i32) {
    %c0_i32 = arith.constant 0 : i32
    %c0_i32_0 = arith.constant 0 : i32
    %c0_i32_1 = arith.constant 0 : i32
    return %c0_i32, %c0_i32_0 : i32, i32
  }
  func.func @transform_15(%arg0: i32) -> (i32, i32) {
    %c0_i32 = arith.constant 0 : i32
    %c0_i32_0 = arith.constant 0 : i32
    return %arg0, %c0_i32 : i32, i32
  }
}

</mosaic_0001>

<llo_original>
// kernel: net_forward.1
$region0: #{net_forward.1}
  #allocation0 [shape = 'u32[]', space=smem, size = 0x4, offset = 0x4, fixed_abs, tag = 'smem constant byte address 0x4 - core index']
  #allocation1 [shape = 'u32[144,128]{1,0:T(1,128)}', space=vmem, size = 0x12000, scoped, tag = 'internal scratch']
  %s0 = inlined_call_operand.vmem [shape: bf16[8,128], index: 0, kind: input, shape index: {}]
  %s1 = inlined_call_operand.vmem [shape: bf16[128,512], index: 1, kind: input, shape index: {}]
  %s2 = inlined_call_operand.vmem [shape: f32[1,512], index: 2, kind: input, shape index: {}]
  %s3 = inlined_call_operand.vmem [shape: bf16[512,512], index: 3, kind: input, shape index: {}]
  %s4 = inlined_call_operand.vmem [shape: f32[1,512], index: 4, kind: input, shape index: {}]
  %s5 = inlined_call_operand.vmem [shape: bf16[512,384], index: 5, kind: input, shape index: {}]
  %s6 = inlined_call_operand.vmem [shape: f32[1,384], index: 6, kind: input, shape index: {}]
  %s7 = inlined_call_operand.vmem [shape: bf16[384,256], index: 7, kind: input, shape index: {}]
  %s8 = inlined_call_operand.vmem [shape: f32[1,256], index: 8, kind: input, shape index: {}]
  %s9 = inlined_call_operand.vmem [shape: bf16[256,256], index: 9, kind: input, shape index: {}]
  %s10 = inlined_call_operand.vmem [shape: f32[1,256], index: 10, kind: input, shape index: {}]
  %s11 = inlined_call_operand.vmem [shape: bf16[256,128], index: 11, kind: input, shape index: {}]
  %s12 = inlined_call_operand.vmem [shape: f32[1,128], index: 12, kind: input, shape index: {}]
  %s13 = inlined_call_operand.vmem [shape: bf16[128,128], index: 13, kind: input, shape index: {}]
  %s14 = inlined_call_operand.vmem [shape: f32[1,128], index: 14, kind: input, shape index: {}]
  %s15 = inlined_call_operand.vmem [shape: f32[8,128], index: 15, kind: output, shape index: {}]
  %s16 = sld [smem:[#allocation0]]
  $region70: #{net_forward.1} parent=0
    _
  %s18 = ssub.s32 1, %s16
  %s19 = scalar_select 0, %s18, %s16
  // Predicated region
  $region2: #{net_forward.1} parent=0 // pred_check
    _
  $region3: #{net_forward.1} parent=0 // pred_check_branch
    %21 = sbr.rel (0) target = $region5
  $region4: #{net_forward.1} parent=0 // pred_region
    _
  $region5: #{net_forward.1} parent=0 // pred_fallthru
    _
  // Predicated region
  $region6: #{net_forward.1} parent=0 // pred_check
    _
  $region7: #{net_forward.1} parent=0 // pred_check_branch
    %23 = sbr.rel (0) target = $region9
  $region8: #{net_forward.1} parent=0 // pred_region
    _
  $region9: #{net_forward.1} parent=0 // pred_fallthru
    _
  // Predicated region
  $region10: #{net_forward.1} parent=0 // pred_check
    _
  $region11: #{net_forward.1} parent=0 // pred_check_branch
    %25 = sbr.rel (0) target = $region13
  $region12: #{net_forward.1} parent=0 // pred_region
    _
  $region13: #{net_forward.1} parent=0 // pred_fallthru
    _
  // Predicated region
  $region14: #{net_forward.1} parent=0 // pred_check
    _
  $region15: #{net_forward.1} parent=0 // pred_check_branch
    %27 = sbr.rel (0) target = $region17
  $region16: #{net_forward.1} parent=0 // pred_region
    _
  $region17: #{net_forward.1} parent=0 // pred_fallthru
    _
  // Predicated region
  $region18: #{net_forward.1} parent=0 // pred_check
    _
  $region19: #{net_forward.1} parent=0 // pred_check_branch
    %29 = sbr.rel (0) target = $region21
  $region20: #{net_forward.1} parent=0 // pred_region
    _
  $region21: #{net_forward.1} parent=0 // pred_fallthru
    _
  // Predicated region
  $region22: #{net_forward.1} parent=0 // pred_check
    _
  $region23: #{net_forward.1} parent=0 // pred_check_branch
    %31 = sbr.rel (0) target = $region25
  $region24: #{net_forward.1} parent=0 // pred_region
    _
  $region25: #{net_forward.1} parent=0 // pred_fallthru
    _
  // Predicated region
  $region26: #{net_forward.1} parent=0 // pred_check
    _
  $region27: #{net_forward.1} parent=0 // pred_check_branch
    %33 = sbr.rel (0) target = $region29
  $region28: #{net_forward.1} parent=0 // pred_region
    _
  $region29: #{net_forward.1} parent=0 // pred_fallthru
    _
  // Predicated region
  $region30: #{net_forward.1} parent=0 // pred_check
    _
  $region31: #{net_forward.1} parent=0 // pred_check_branch
    %35 = sbr.rel (0) target = $region33
  $region32: #{net_forward.1} parent=0 // pred_region
    _
  $region33: #{net_forward.1} parent=0 // pred_fallthru
    _
  // Predicated region
  $region34: #{net_forward.1} parent=0 // pred_check
    _
  $region35: #{net_forward.1} parent=0 // pred_check_branch
    %37 = sbr.rel (0) target = $region37
  $region36: #{net_forward.1} parent=0 // pred_region
    _
  $region37: #{net_forward.1} parent=0 // pred_fallthru
    _
  // Predicated region
  $region38: #{net_forward.1} parent=0 // pred_check
    _
  $region39: #{net_forward.1} parent=0 // pred_check_branch
    %39 = sbr.rel (0) target = $region41
  $region40: #{net_forward.1} parent=0 // pred_region
    _
  $region41: #{net_forward.1} parent=0 // pred_fallthru
    _
  // Predicated region
  $region42: #{net_forward.1} parent=0 // pred_check
    _
  $region43: #{net_forward.1} parent=0 // pred_check_branch
    %41 = sbr.rel (0) target = $region45
  $region44: #{net_forward.1} parent=0 // pred_region
    _
  $region45: #{net_forward.1} parent=0 // pred_fallthru
    _
  // Predicated region
  $region46: #{net_forward.1} parent=0 // pred_check
    _
  $region47: #{net_forward.1} parent=0 // pred_check_branch
    %43 = sbr.rel (0) target = $region49
  $region48: #{net_forward.1} parent=0 // pred_region
    _
  $region49: #{net_forward.1} parent=0 // pred_fallthru
    _
  // Predicated region
  $region50: #{net_forward.1} parent=0 // pred_check
    _
  $region51: #{net_forward.1} parent=0 // pred_check_branch
    %45 = sbr.rel (0) target = $region53
  $region52: #{net_forward.1} parent=0 // pred_region
    _
  $region53: #{net_forward.1} parent=0 // pred_fallthru
    _
  // Predicated region
  $region54: #{net_forward.1} parent=0 // pred_check
    _
  $region55: #{net_forward.1} parent=0 // pred_check_branch
    %47 = sbr.rel (0) target = $region57
  $region56: #{net_forward.1} parent=0 // pred_region
    _
  $region57: #{net_forward.1} parent=0 // pred_fallthru
    _
  // Predicated region
  $region58: #{net_forward.1} parent=0 // pred_check
    _
  $region59: #{net_forward.1} parent=0 // pred_check_branch
    %49 = sbr.rel (0) target = $region61
  $region60: #{net_forward.1} parent=0 // pred_region
    _
  $region61: #{net_forward.1} parent=0 // pred_fallthru
    _
  %v51 = vld [vmem:[%s0] sm:$0xf]
  %v52 = vld [vmem:[%s1] sm:$0xff]
  %v53 = vld [vmem:[%s1 + $0x8] sm:$0xff]
  %v54 = vld [vmem:[%s1 + $0x10] sm:$0xff]
  %v55 = vld [vmem:[%s1 + $0x18] sm:$0xff]
  %v56 = vld [vmem:[%s1 + $0x20] sm:$0xff]
  %v57 = vld [vmem:[%s1 + $0x28] sm:$0xff]
  %v58 = vld [vmem:[%s1 + $0x30] sm:$0xff]
  %v59 = vld [vmem:[%s1 + $0x38] sm:$0xff]
  %v60 = vld [vmem:[%s1 + $0x40] sm:$0xff]
  %v61 = vld [vmem:[%s1 + $0x48] sm:$0xff]
  %v62 = vld [vmem:[%s1 + $0x50] sm:$0xff]
  %v63 = vld [vmem:[%s1 + $0x58] sm:$0xff]
  %v64 = vld [vmem:[%s1 + $0x60] sm:$0xff]
  %v65 = vld [vmem:[%s1 + $0x68] sm:$0xff]
  %v66 = vld [vmem:[%s1 + $0x70] sm:$0xff]
  %v67 = vld [vmem:[%s1 + $0x78] sm:$0xff]
  %v68 = vld [vmem:[%s1 + $0x80] sm:$0xff]
  %v69 = vld [vmem:[%s1 + $0x88] sm:$0xff]
  %v70 = vld [vmem:[%s1 + $0x90] sm:$0xff]
  %v71 = vld [vmem:[%s1 + $0x98] sm:$0xff]
  %v72 = vld [vmem:[%s1 + $0xa0] sm:$0xff]
  %v73 = vld [vmem:[%s1 + $0xa8] sm:$0xff]
  %v74 = vld [vmem:[%s1 + $0xb0] sm:$0xff]
  %v75 = vld [vmem:[%s1 + $0xb8] sm:$0xff]
  %v76 = vld [vmem:[%s1 + $0xc0] sm:$0xff]
  %v77 = vld [vmem:[%s1 + $0xc8] sm:$0xff]
  %v78 = vld [vmem:[%s1 + $0xd0] sm:$0xff]
  %v79 = vld [vmem:[%s1 + $0xd8] sm:$0xff]
  %v80 = vld [vmem:[%s1 + $0xe0] sm:$0xff]
  %v81 = vld [vmem:[%s1 + $0xe8] sm:$0xff]
  %v82 = vld [vmem:[%s1 + $0xf0] sm:$0xff]
  %v83 = vld [vmem:[%s1 + $0xf8] sm:$0xff]
  %v84 = vld [vmem:[%s2] sm:$0xf]
  %v86 = vlaneseq
  %v87 = vshrl.u32 %v86, 7
  %v88 = vsub.s32 0, %v87
  %v89 = vrot.slane %v84, %v88
  %v90 = vlaneseq
  %v91 = vshrl.u32 %v90, 7
  %v92 = vsub.s32 1, %v91
  %v93 = vrot.slane %v84, %v92
  %v94 = vlaneseq
  %v95 = vshrl.u32 %v94, 7
  %v96 = vsub.s32 2, %v95
  %v97 = vrot.slane %v84, %v96
  %v98 = vlaneseq
  %v99 = vshrl.u32 %v98, 7
  %v100 = vsub.s32 3, %v99
  %v101 = vrot.slane %v84, %v100
  %v138 = vunpack.c.l.b16 %v52
  %v139 = vunpack.c.h.b16 %v52
  %v140 = vunpack.c.l.b16 %v53
  %v141 = vunpack.c.h.b16 %v53
  %v142 = vunpack.c.l.b16 %v54
  %v143 = vunpack.c.h.b16 %v54
  %v144 = vunpack.c.l.b16 %v55
  %v145 = vunpack.c.h.b16 %v55
  %v146 = vunpack.c.l.b16 %v56
  %v147 = vunpack.c.h.b16 %v56
  %v148 = vunpack.c.l.b16 %v57
  %v149 = vunpack.c.h.b16 %v57
  %v150 = vunpack.c.l.b16 %v58
  %v151 = vunpack.c.h.b16 %v58
  %v152 = vunpack.c.l.b16 %v59
  %v153 = vunpack.c.h.b16 %v59
  %v154 = vunpack.c.l.b16 %v60
  %v155 = vunpack.c.h.b16 %v60
  %v156 = vunpack.c.l.b16 %v61
  %v157 = vunpack.c.h.b16 %v61
  %v158 = vunpack.c.l.b16 %v62
  %v159 = vunpack.c.h.b16 %v62
  %v160 = vunpack.c.l.b16 %v63
  %v161 = vunpack.c.h.b16 %v63
  %v162 = vunpack.c.l.b16 %v64
  %v163 = vunpack.c.h.b16 %v64
  %v164 = vunpack.c.l.b16 %v65
  %v165 = vunpack.c.h.b16 %v65
  %v166 = vunpack.c.l.b16 %v66
  %v167 = vunpack.c.h.b16 %v66
  %v168 = vunpack.c.l.b16 %v67
  %v169 = vunpack.c.h.b16 %v67
  %v170 = vunpack.c.l.b16 %v68
  %v171 = vunpack.c.h.b16 %v68
  %v172 = vunpack.c.l.b16 %v69
  %v173 = vunpack.c.h.b16 %v69
  %v174 = vunpack.c.l.b16 %v70
  %v175 = vunpack.c.h.b16 %v70
  %v176 = vunpack.c.l.b16 %v71
  %v177 = vunpack.c.h.b16 %v71
  %v178 = vunpack.c.l.b16 %v72
  %v179 = vunpack.c.h.b16 %v72
  %v180 = vunpack.c.l.b16 %v73
  %v181 = vunpack.c.h.b16 %v73
  %v182 = vunpack.c.l.b16 %v74
  %v183 = vunpack.c.h.b16 %v74
  %v184 = vunpack.c.l.b16 %v75
  %v185 = vunpack.c.h.b16 %v75
  %v186 = vunpack.c.l.b16 %v76
  %v187 = vunpack.c.h.b16 %v76
  %v188 = vunpack.c.l.b16 %v77
  %v189 = vunpack.c.h.b16 %v77
  %v190 = vunpack.c.l.b16 %v78
  %v191 = vunpack.c.h.b16 %v78
  %v192 = vunpack.c.l.b16 %v79
  %v193 = vunpack.c.h.b16 %v79
  %v194 = vunpack.c.l.b16 %v80
  %v195 = vunpack.c.h.b16 %v80
  %v196 = vunpack.c.l.b16 %v81
  %v197 = vunpack.c.h.b16 %v81
  %v198 = vunpack.c.l.b16 %v82
  %v199 = vunpack.c.h.b16 %v82
  %v200 = vunpack.c.l.b16 %v83
  %v201 = vunpack.c.h.b16 %v83
  %v202 = vpack.c.b16 %v142, %v138
  %v203 = vpack.c.b16 %v143, %v139
  %v204 = vpack.c.b16 %v144, %v140
  %v205 = vpack.c.b16 %v145, %v141
  %v206 = vpack.c.b16 %v150, %v146
  %v207 = vpack.c.b16 %v151, %v147
  %v208 = vpack.c.b16 %v152, %v148
  %v209 = vpack.c.b16 %v153, %v149
  %v210 = vpack.c.b16 %v158, %v154
  %v211 = vpack.c.b16 %v159, %v155
  %v212 = vpack.c.b16 %v160, %v156
  %v213 = vpack.c.b16 %v161, %v157
  %v214 = vpack.c.b16 %v166, %v162
  %v215 = vpack.c.b16 %v167, %v163
  %v216 = vpack.c.b16 %v168, %v164
  %v217 = vpack.c.b16 %v169, %v165
  %v218 = vpack.c.b16 %v174, %v170
  %v219 = vpack.c.b16 %v175, %v171
  %v220 = vpack.c.b16 %v176, %v172
  %v221 = vpack.c.b16 %v177, %v173
  %v222 = vpack.c.b16 %v182, %v178
  %v223 = vpack.c.b16 %v183, %v179
  %v224 = vpack.c.b16 %v184, %v180
  %v225 = vpack.c.b16 %v185, %v181
  %v226 = vpack.c.b16 %v190, %v186
  %v227 = vpack.c.b16 %v191, %v187
  %v228 = vpack.c.b16 %v192, %v188
  %v229 = vpack.c.b16 %v193, %v189
  %v230 = vpack.c.b16 %v198, %v194
  %v231 = vpack.c.b16 %v199, %v195
  %v232 = vpack.c.b16 %v200, %v196
  %v233 = vpack.c.b16 %v201, %v197
  %266 = vmatprep.subr.bf16.mxu0 %v203
  %267 = vmatpush1.bf16.msra.mxu0 %v202
  %268 = vmatprep.subr.bf16.mxu0 %v207
  %269 = vmatpush1.bf16.msra.mxu0 %v206
  %270 = vmatprep.subr.bf16.mxu0 %v211
  %271 = vmatpush1.bf16.msra.mxu0 %v210
  %272 = vmatprep.subr.bf16.mxu0 %v215
  %273 = vmatpush1.bf16.msra.mxu0 %v214
  %274 = vmatprep.subr.bf16.mxu0 %v219
  %275 = vmatpush1.bf16.msra.mxu0 %v218
  %276 = vmatprep.subr.bf16.mxu0 %v223
  %277 = vmatpush1.bf16.msra.mxu0 %v222
  %278 = vmatprep.subr.bf16.mxu0 %v227
  %279 = vmatpush1.bf16.msra.mxu0 %v226
  %280 = vmatprep.subr.bf16.mxu0 %v231
  %281 = vmatpush1.bf16.msra.mxu0 %v230
  %282 = vmatprep.subr.bf16.mxu0 0
  %283 = vmatpush1.bf16.msra.mxu0 0
  %284 = vmatprep.subr.bf16.mxu0 0
  %285 = vmatpush1.bf16.msra.mxu0 0
  %286 = vmatprep.subr.bf16.mxu0 0
  %287 = vmatpush1.bf16.msra.mxu0 0
  %288 = vmatprep.subr.bf16.mxu0 0
  %289 = vmatpush1.bf16.msra.mxu0 0
  %290 = vmatprep.subr.bf16.mxu0 0
  %291 = vmatpush1.bf16.msra.mxu0 0
  %292 = vmatprep.subr.bf16.mxu0 0
  %293 = vmatpush1.bf16.msra.mxu0 0
  %294 = vmatprep.subr.bf16.mxu0 0
  %295 = vmatpush1.bf16.msra.mxu0 0
  %296 = vmatprep.subr.bf16.mxu0 0
  %297 = vmatpush1.bf16.msra.mxu0 0
  %298 = vmatprep.mubr.bf16.mxu0 0
  %299 = vmatmul.mubr.bf16.gmra.mrb[0].mxu0 %v51
  %v300 = vpop.f32.mrb[0].mxu0
  %v301 = vadd.f32 %v89, %v300
  %v302 = vpop.f32.mrb[0].mxu0
  %v303 = vadd.f32 %v93, %v302
  %v304 = vpop.f32.mrb[0].mxu0
  %v305 = vpop.f32.mrb[0].mxu0
  %306 = vdwg.mxu0
  %307 = vmatprep.subr.bf16.mxu0 %v205
  %308 = vmatpush1.bf16.msra.mxu0 %v204
  %309 = vmatprep.subr.bf16.mxu0 %v209
  %310 = vmatpush1.bf16.msra.mxu0 %v208
  %311 = vmatprep.subr.bf16.mxu0 %v213
  %312 = vmatpush1.bf16.msra.mxu0 %v212
  %313 = vmatprep.subr.bf16.mxu0 %v217
  %314 = vmatpush1.bf16.msra.mxu0 %v216
  %315 = vmatprep.subr.bf16.mxu0 %v221
  %316 = vmatpush1.bf16.msra.mxu0 %v220
  %317 = vmatprep.subr.bf16.mxu0 %v225
  %318 = vmatpush1.bf16.msra.mxu0 %v224
  %319 = vmatprep.subr.bf16.mxu0 %v229
  %320 = vmatpush1.bf16.msra.mxu0 %v228
  %321 = vmatprep.subr.bf16.mxu0 %v233
  %322 = vmatpush1.bf16.msra.mxu0 %v232
  %323 = vmatprep.subr.bf16.mxu0 0
  %324 = vmatpush1.bf16.msra.mxu0 0
  %325 = vmatprep.subr.bf16.mxu0 0
  %326 = vmatpush1.bf16.msra.mxu0 0
  %327 = vmatprep.subr.bf16.mxu0 0
  %328 = vmatpush1.bf16.msra.mxu0 0
  %329 = vmatprep.subr.bf16.mxu0 0
  %330 = vmatpush1.bf16.msra.mxu0 0
  %331 = vmatprep.subr.bf16.mxu0 0
  %332 = vmatpush1.bf16.msra.mxu0 0
  %333 = vmatprep.subr.bf16.mxu0 0
  %334 = vmatpush1.bf16.msra.mxu0 0
  %335 = vmatprep.subr.bf16.mxu0 0
  %336 = vmatpush1.bf16.msra.mxu0 0
  %337 = vmatprep.subr.bf16.mxu0 0
  %338 = vmatpush1.bf16.msra.mxu0 0
  %339 = vmatprep.mubr.bf16.mxu0 0
  %340 = vmatmul.mubr.bf16.gmra.mrb[0].mxu0 %v51
  %v341 = vpop.f32.mrb[0].mxu0
  %v342 = vadd.f32 %v97, %v341
  %v343 = vpop.f32.mrb[0].mxu0
  %v344 = vadd.f32 %v101, %v343
  %v345 = vpop.f32.mrb[0].mxu0
  %v346 = vpop.f32.mrb[0].mxu0
  %347 = vdwg.mxu0
  %v348 = vmax.f32 %v301, 0.0
  %v349 = vmax.f32 %v303, 0.0
  %v350 = vmax.f32 %v342, 0.0
  %v351 = vmax.f32 %v344, 0.0
  %v352 = vpack.c.bf16 %v348, %v348
  %v353 = vpack.c.bf16 %v349, %v349
  %v354 = vpack.c.bf16 %v350, %v350
  %v355 = vpack.c.bf16 %v351, %v351
  %v356 = vld [vmem:[%s3] sm:$0xff]
  %v357 = vld [vmem:[%s3 + $0x8] sm:$0xff]
  %v358 = vld [vmem:[%s3 + $0x10] sm:$0xff]
  %v359 = vld [vmem:[%s3 + $0x18] sm:$0xff]
  %v360 = vld [vmem:[%s3 + $0x20] sm:$0xff]
  %v361 = vld [vmem:[%s3 + $0x28] sm:$0xff]
  %v362 = vld [vmem:[%s3 + $0x30] sm:$0xff]
  %v363 = vld [vmem:[%s3 + $0x38] sm:$0xff]
  %v364 = vld [vmem:[%s3 + $0x40] sm:$0xff]
  %v365 = vld [vmem:[%s3 + $0x48] sm:$0xff]
  %v366 = vld [vmem:[%s3 + $0x50] sm:$0xff]
  %v367 = vld [vmem:[%s3 + $0x58] sm:$0xff]
  %v368 = vld [vmem:[%s3 + $0x60] sm:$0xff]
  %v369 = vld [vmem:[%s3 + $0x68] sm:$0xff]
  %v370 = vld [vmem:[%s3 + $0x70] sm:$0xff]
  %v371 = vld [vmem:[%s3 + $0x78] sm:$0xff]
  %v372 = vld [vmem:[%s3 + $0x80] sm:$0xff]
  %v373 = vld [vmem:[%s3 + $0x88] sm:$0xff]
  %v374 = vld [vmem:[%s3 + $0x90] sm:$0xff]
  %v375 = vld [vmem:[%s3 + $0x98] sm:$0xff]
  %v376 = vld [vmem:[%s3 + $0xa0] sm:$0xff]
  %v377 = vld [vmem:[%s3 + $0xa8] sm:$0xff]
  %v378 = vld [vmem:[%s3 + $0xb0] sm:$0xff]
  %v379 = vld [vmem:[%s3 + $0xb8] sm:$0xff]
  %v380 = vld [vmem:[%s3 + $0xc0] sm:$0xff]
  %v381 = vld [vmem:[%s3 + $0xc8] sm:$0xff]
  %v382 = vld [vmem:[%s3 + $0xd0] sm:$0xff]
  %v383 = vld [vmem:[%s3 + $0xd8] sm:$0xff]
  %v384 = vld [vmem:[%s3 + $0xe0] sm:$0xff]
  %v385 = vld [vmem:[%s3 + $0xe8] sm:$0xff]
  %v386 = vld [vmem:[%s3 + $0xf0] sm:$0xff]
  %v387 = vld [vmem:[%s3 + $0xf8] sm:$0xff]
  %v388 = vld [vmem:[%s3 + $0x100] sm:$0xff]
  %v389 = vld [vmem:[%s3 + $0x108] sm:$0xff]
  %v390 = vld [vmem:[%s3 + $0x110] sm:$0xff]
  %v391 = vld [vmem:[%s3 + $0x118] sm:$0xff]
  %v392 = vld [vmem:[%s3 + $0x120] sm:$0xff]
  %v393 = vld [vmem:[%s3 + $0x128] sm:$0xff]
  %v394 = vld [vmem:[%s3 + $0x130] sm:$0xff]
  %v395 = vld [vmem:[%s3 + $0x138] sm:$0xff]
  %v396 = vld [vmem:[%s3 + $0x140] sm:$0xff]
  %v397 = vld [vmem:[%s3 + $0x148] sm:$0xff]
  %v398 = vld [vmem:[%s3 + $0x150] sm:$0xff]
  %v399 = vld [vmem:[%s3 + $0x158] sm:$0xff]
  %v400 = vld [vmem:[%s3 + $0x160] sm:$0xff]
  %v401 = vld [vmem:[%s3 + $0x168] sm:$0xff]
  %v402 = vld [vmem:[%s3 + $0x170] sm:$0xff]
  %v403 = vld [vmem:[%s3 + $0x178] sm:$0xff]
  %v404 = vld [vmem:[%s3 + $0x180] sm:$0xff]
  %v405 = vld [vmem:[%s3 + $0x188] sm:$0xff]
  %v406 = vld [vmem:[%s3 + $0x190] sm:$0xff]
  %v407 = vld [vmem:[%s3 + $0x198] sm:$0xff]
  %v408 = vld [vmem:[%s3 + $0x1a0] sm:$0xff]
  %v409 = vld [vmem:[%s3 + $0x1a8] sm:$0xff]
  %v410 = vld [vmem:[%s3 + $0x1b0] sm:$0xff]
  %v411 = vld [vmem:[%s3 + $0x1b8] sm:$0xff]
  %v412 = vld [vmem:[%s3 + $0x1c0] sm:$0xff]
  %v413 = vld [vmem:[%s3 + $0x1c8] sm:$0xff]
  %v414 = vld [vmem:[%s3 + $0x1d0] sm:$0xff]
  %v415 = vld [vmem:[%s3 + $0x1d8] sm:$0xff]
  %v416 = vld [vmem:[%s3 + $0x1e0] sm:$0xff]
  %v417 = vld [vmem:[%s3 + $0x1e8] sm:$0xff]
  %v418 = vld [vmem:[%s3 + $0x1f0] sm:$0xff]
  %v419 = vld [vmem:[%s3 + $0x1f8] sm:$0xff]
  %v420 = vld [vmem:[%s3 + $0x200] sm:$0xff]
  %v421 = vld [vmem:[%s3 + $0x208] sm:$0xff]
  %v422 = vld [vmem:[%s3 + $0x210] sm:$0xff]
  %v423 = vld [vmem:[%s3 + $0x218] sm:$0xff]
  %v424 = vld [vmem:[%s3 + $0x220] sm:$0xff]
  %v425 = vld [vmem:[%s3 + $0x228] sm:$0xff]
  %v426 = vld [vmem:[%s3 + $0x230] sm:$0xff]
  %v427 = vld [vmem:[%s3 + $0x238] sm:$0xff]
  %v428 = vld [vmem:[%s3 + $0x240] sm:$0xff]
  %v429 = vld [vmem:[%s3 + $0x248] sm:$0xff]
  %v430 = vld [vmem:[%s3 + $0x250] sm:$0xff]
  %v431 = vld [vmem:[%s3 + $0x258] sm:$0xff]
  %v432 = vld [vmem:[%s3 + $0x260] sm:$0xff]
  %v433 = vld [vmem:[%s3 + $0x268] sm:$0xff]
  %v434 = vld [vmem:[%s3 + $0x270] sm:$0xff]
  %v435 = vld [vmem:[%s3 + $0x278] sm:$0xff]
  %v436 = vld [vmem:[%s3 + $0x280] sm:$0xff]
  %v437 = vld [vmem:[%s3 + $0x288] sm:$0xff]
  %v438 = vld [vmem:[%s3 + $0x290] sm:$0xff]
  %v439 = vld [vmem:[%s3 + $0x298] sm:$0xff]
  %v440 = vld [vmem:[%s3 + $0x2a0] sm:$0xff]
  %v441 = vld [vmem:[%s3 + $0x2a8] sm:$0xff]
  %v442 = vld [vmem:[%s3 + $0x2b0] sm:$0xff]
  %v443 = vld [vmem:[%s3 + $0x2b8] sm:$0xff]
  %v444 = vld [vmem:[%s3 + $0x2c0] sm:$0xff]
  %v445 = vld [vmem:[%s3 + $0x2c8] sm:$0xff]
  %v446 = vld [vmem:[%s3 + $0x2d0] sm:$0xff]
  %v447 = vld [vmem:[%s3 + $0x2d8] sm:$0xff]
  %v448 = vld [vmem:[%s3 + $0x2e0] sm:$0xff]
  %v449 = vld [vmem:[%s3 + $0x2e8] sm:$0xff]
  %v450 = vld [vmem:[%s3 + $0x2f0] sm:$0xff]
  %v451 = vld [vmem:[%s3 + $0x2f8] sm:$0xff]
  %v452 = vld [vmem:[%s3 + $0x300] sm:$0xff]
  %v453 = vld [vmem:[%s3 + $0x308] sm:$0xff]
  %v454 = vld [vmem:[%s3 + $0x310] sm:$0xff]
  %v455 = vld [vmem:[%s3 + $0x318] sm:$0xff]
  %v456 = vld [vmem:[%s3 + $0x320] sm:$0xff]
  %v457 = vld [vmem:[%s3 + $0x328] sm:$0xff]
  %v458 = vld [vmem:[%s3 + $0x330] sm:$0xff]
  %v459 = vld [vmem:[%s3 + $0x338] sm:$0xff]
  %v460 = vld [vmem:[%s3 + $0x340] sm:$0xff]
  %v461 = vld [vmem:[%s3 + $0x348] sm:$0xff]
  %v462 = vld [vmem:[%s3 + $0x350] sm:$0xff]
  %v463 = vld [vmem:[%s3 + $0x358] sm:$0xff]
  %v464 = vld [vmem:[%s3 + $0x360] sm:$0xff]
  %v465 = vld [vmem:[%s3 + $0x368] sm:$0xff]
  %v466 = vld [vmem:[%s3 + $0x370] sm:$0xff]
  %v467 = vld [vmem:[%s3 + $0x378] sm:$0xff]
  %v468 = vld [vmem:[%s3 + $0x380] sm:$0xff]
  %v469 = vld [vmem:[%s3 + $0x388] sm:$0xff]
  %v470 = vld [vmem:[%s3 + $0x390] sm:$0xff]
  %v471 = vld [vmem:[%s3 + $0x398] sm:$0xff]
  %v472 = vld [vmem:[%s3 + $0x3a0] sm:$0xff]
  %v473 = vld [vmem:[%s3 + $0x3a8] sm:$0xff]
  %v474 = vld [vmem:[%s3 + $0x3b0] sm:$0xff]
  %v475 = vld [vmem:[%s3 + $0x3b8] sm:$0xff]
  %v476 = vld [vmem:[%s3 + $0x3c0] sm:$0xff]
  %v477 = vld [vmem:[%s3 + $0x3c8] sm:$0xff]
  %v478 = vld [vmem:[%s3 + $0x3d0] sm:$0xff]
  %v479 = vld [vmem:[%s3 + $0x3d8] sm:$0xff]
  %v480 = vld [vmem:[%s3 + $0x3e0] sm:$0xff]
  %v481 = vld [vmem:[%s3 + $0x3e8] sm:$0xff]
  %v482 = vld [vmem:[%s3 + $0x3f0] sm:$0xff]
  %v483 = vld [vmem:[%s3 + $0x3f8] sm:$0xff]
  %v484 = vld [vmem:[%s4] sm:$0xf]
  %v486 = vlaneseq
  %v487 = vshrl.u32 %v486, 7
  %v488 = vsub.s32 0, %v487
  %v489 = vrot.slane %v484, %v488
  %v490 = vlaneseq
  %v491 = vshrl.u32 %v490, 7
  %v492 = vsub.s32 1, %v491
  %v493 = vrot.slane %v484, %v492
  %v494 = vlaneseq
  %v495 = vshrl.u32 %v494, 7
  %v496 = vsub.s32 2, %v495
  %v497 = vrot.slane %v484, %v496
  %v498 = vlaneseq
  %v499 = vshrl.u32 %v498, 7
  %v500 = vsub.s32 3, %v499
  %v501 = vrot.slane %v484, %v500
  %v634 = vunpack.c.l.b16 %v356
  %v635 = vunpack.c.h.b16 %v356
  %v636 = vunpack.c.l.b16 %v357
  %v637 = vunpack.c.h.b16 %v357
  %v638 = vunpack.c.l.b16 %v358
  %v639 = vunpack.c.h.b16 %v358
  %v640 = vunpack.c.l.b16 %v359
  %v641 = vunpack.c.h.b16 %v359
  %v642 = vunpack.c.l.b16 %v360
  %v643 = vunpack.c.h.b16 %v360
  %v644 = vunpack.c.l.b16 %v361
  %v645 = vunpack.c.h.b16 %v361
  %v646 = vunpack.c.l.b16 %v362
  %v647 = vunpack.c.h.b16 %v362
  %v648 = vunpack.c.l.b16 %v363
  %v649 = vunpack.c.h.b16 %v363
  %v650 = vunpack.c.l.b16 %v364
  %v651 = vunpack.c.h.b16 %v364
  %v652 = vunpack.c.l.b16 %v365
  %v653 = vunpack.c.h.b16 %v365
  %v654 = vunpack.c.l.b16 %v366
  %v655 = vunpack.c.h.b16 %v366
  %v656 = vunpack.c.l.b16 %v367
  %v657 = vunpack.c.h.b16 %v367
  %v658 = vunpack.c.l.b16 %v368
  %v659 = vunpack.c.h.b16 %v368
  %v660 = vunpack.c.l.b16 %v369
  %v661 = vunpack.c.h.b16 %v369
  %v662 = vunpack.c.l.b16 %v370
  %v663 = vunpack.c.h.b16 %v370
  %v664 = vunpack.c.l.b16 %v371
  %v665 = vunpack.c.h.b16 %v371
  %v666 = vunpack.c.l.b16 %v372
  %v667 = vunpack.c.h.b16 %v372
  %v668 = vunpack.c.l.b16 %v373
  %v669 = vunpack.c.h.b16 %v373
  %v670 = vunpack.c.l.b16 %v374
  %v671 = vunpack.c.h.b16 %v374
  %v672 = vunpack.c.l.b16 %v375
  %v673 = vunpack.c.h.b16 %v375
  %v674 = vunpack.c.l.b16 %v376
  %v675 = vunpack.c.h.b16 %v376
  %v676 = vunpack.c.l.b16 %v377
  %v677 = vunpack.c.h.b16 %v377
  %v678 = vunpack.c.l.b16 %v378
  %v679 = vunpack.c.h.b16 %v378
  %v680 = vunpack.c.l.b16 %v379
  %v681 = vunpack.c.h.b16 %v379
  %v682 = vunpack.c.l.b16 %v380
  %v683 = vunpack.c.h.b16 %v380
  %v684 = vunpack.c.l.b16 %v381
  %v685 = vunpack.c.h.b16 %v381
  %v686 = vunpack.c.l.b16 %v382
  %v687 = vunpack.c.h.b16 %v382
  %v688 = vunpack.c.l.b16 %v383
  %v689 = vunpack.c.h.b16 %v383
  %v690 = vunpack.c.l.b16 %v384
  %v691 = vunpack.c.h.b16 %v384
  %v692 = vunpack.c.l.b16 %v385
  %v693 = vunpack.c.h.b16 %v385
  %v694 = vunpack.c.l.b16 %v386
  %v695 = vunpack.c.h.b16 %v386
  %v696 = vunpack.c.l.b16 %v387
  %v697 = vunpack.c.h.b16 %v387
  %v698 = vunpack.c.l.b16 %v388
  %v699 = vunpack.c.h.b16 %v388
  %v700 = vunpack.c.l.b16 %v389
  %v701 = vunpack.c.h.b16 %v389
  %v702 = vunpack.c.l.b16 %v390
  %v703 = vunpack.c.h.b16 %v390
  %v704 = vunpack.c.l.b16 %v391
  %v705 = vunpack.c.h.b16 %v391
  %v706 = vunpack.c.l.b16 %v392
  %v707 = vunpack.c.h.b16 %v392
  %v708 = vunpack.c.l.b16 %v393
  %v709 = vunpack.c.h.b16 %v393
  %v710 = vunpack.c.l.b16 %v394
  %v711 = vunpack.c.h.b16 %v394
  %v712 = vunpack.c.l.b16 %v395
  %v713 = vunpack.c.h.b16 %v395
  %v714 = vunpack.c.l.b16 %v396
  %v715 = vunpack.c.h.b16 %v396
  %v716 = vunpack.c.l.b16 %v397
  %v717 = vunpack.c.h.b16 %v397
  %v718 = vunpack.c.l.b16 %v398
  %v719 = vunpack.c.h.b16 %v398
  %v720 = vunpack.c.l.b16 %v399
  %v721 = vunpack.c.h.b16 %v399
  %v722 = vunpack.c.l.b16 %v400
  %v723 = vunpack.c.h.b16 %v400
  %v724 = vunpack.c.l.b16 %v401
  %v725 = vunpack.c.h.b16 %v401
  %v726 = vunpack.c.l.b16 %v402
  %v727 = vunpack.c.h.b16 %v402
  %v728 = vunpack.c.l.b16 %v403
  %v729 = vunpack.c.h.b16 %v403
  %v730 = vunpack.c.l.b16 %v404
  %v731 = vunpack.c.h.b16 %v404
  %v732 = vunpack.c.l.b16 %v405
  %v733 = vunpack.c.h.b16 %v405
  %v734 = vunpack.c.l.b16 %v406
  %v735 = vunpack.c.h.b16 %v406
  %v736 = vunpack.c.l.b16 %v407
  %v737 = vunpack.c.h.b16 %v407
  %v738 = vunpack.c.l.b16 %v408
  %v739 = vunpack.c.h.b16 %v408
  %v740 = vunpack.c.l.b16 %v409
  %v741 = vunpack.c.h.b16 %v409
  %v742 = vunpack.c.l.b16 %v410
  %v743 = vunpack.c.h.b16 %v410
  %v744 = vunpack.c.l.b16 %v411
  %v745 = vunpack.c.h.b16 %v411
  %v746 = vunpack.c.l.b16 %v412
  %v747 = vunpack.c.h.b16 %v412
  %v748 = vunpack.c.l.b16 %v413
  %v749 = vunpack.c.h.b16 %v413
  %v750 = vunpack.c.l.b16 %v414
  %v751 = vunpack.c.h.b16 %v414
  %v752 = vunpack.c.l.b16 %v415
  %v753 = vunpack.c.h.b16 %v415
  %v754 = vunpack.c.l.b16 %v416
  %v755 = vunpack.c.h.b16 %v416
  %v756 = vunpack.c.l.b16 %v417
  %v757 = vunpack.c.h.b16 %v417
  %v758 = vunpack.c.l.b16 %v418
  %v759 = vunpack.c.h.b16 %v418
  %v760 = vunpack.c.l.b16 %v419
  %v761 = vunpack.c.h.b16 %v419
  %v762 = vunpack.c.l.b16 %v420
  %v763 = vunpack.c.h.b16 %v420
  %v764 = vunpack.c.l.b16 %v421
  %v765 = vunpack.c.h.b16 %v421
  %v766 = vunpack.c.l.b16 %v422
  %v767 = vunpack.c.h.b16 %v422
  %v768 = vunpack.c.l.b16 %v423
  %v769 = vunpack.c.h.b16 %v423
  %v770 = vunpack.c.l.b16 %v424
  %v771 = vunpack.c.h.b16 %v424
  %v772 = vunpack.c.l.b16 %v425
  %v773 = vunpack.c.h.b16 %v425
  %v774 = vunpack.c.l.b16 %v426
  %v775 = vunpack.c.h.b16 %v426
  %v776 = vunpack.c.l.b16 %v427
  %v777 = vunpack.c.h.b16 %v427
  %v778 = vunpack.c.l.b16 %v428
  %v779 = vunpack.c.h.b16 %v428
  %v780 = vunpack.c.l.b16 %v429
  %v781 = vunpack.c.h.b16 %v429
  %v782 = vunpack.c.l.b16 %v430
  %v783 = vunpack.c.h.b16 %v430
  %v784 = vunpack.c.l.b16 %v431
  %v785 = vunpack.c.h.b16 %v431
  %v786 = vunpack.c.l.b16 %v432
  %v787 = vunpack.c.h.b16 %v432
  %v788 = vunpack.c.l.b16 %v433
  %v789 = vunpack.c.h.b16 %v433
  %v790 = vunpack.c.l.b16 %v434
  %v791 = vunpack.c.h.b16 %v434
  %v792 = vunpack.c.l.b16 %v435
  %v793 = vunpack.c.h.b16 %v435
  %v794 = vunpack.c.l.b16 %v436
  %v795 = vunpack.c.h.b16 %v436
  %v796 = vunpack.c.l.b16 %v437
  %v797 = vunpack.c.h.b16 %v437
  %v798 = vunpack.c.l.b16 %v438
  %v799 = vunpack.c.h.b16 %v438
  %v800 = vunpack.c.l.b16 %v439
  %v801 = vunpack.c.h.b16 %v439
  %v802 = vunpack.c.l.b16 %v440
  %v803 = vunpack.c.h.b16 %v440
  %v804 = vunpack.c.l.b16 %v441
  %v805 = vunpack.c.h.b16 %v441
  %v806 = vunpack.c.l.b16 %v442
  %v807 = vunpack.c.h.b16 %v442
  %v808 = vunpack.c.l.b16 %v443
  %v809 = vunpack.c.h.b16 %v443
  %v810 = vunpack.c.l.b16 %v444
  %v811 = vunpack.c.h.b16 %v444
  %v812 = vunpack.c.l.b16 %v445
  %v813 = vunpack.c.h.b16 %v445
  %v814 = vunpack.c.l.b16 %v446
  %v815 = vunpack.c.h.b16 %v446
  %v816 = vunpack.c.l.b16 %v447
  %v817 = vunpack.c.h.b16 %v447
  %v818 = vunpack.c.l.b16 %v448
  %v819 = vunpack.c.h.b16 %v448
  %v820 = vunpack.c.l.b16 %v449
  %v821 = vunpack.c.h.b16 %v449
  %v822 = vunpack.c.l.b16 %v450
  %v823 = vunpack.c.h.b16 %v450
  %v824 = vunpack.c.l.b16 %v451
  %v825 = vunpack.c.h.b16 %v451
  %v826 = vunpack.c.l.b16 %v452
  %v827 = vunpack.c.h.b16 %v452
  %v828 = vunpack.c.l.b16 %v453
  %v829 = vunpack.c.h.b16 %v453
  %v830 = vunpack.c.l.b16 %v454
  %v831 = vunpack.c.h.b16 %v454
  %v832 = vunpack.c.l.b16 %v455
  %v833 = vunpack.c.h.b16 %v455
  %v834 = vunpack.c.l.b16 %v456
  %v835 = vunpack.c.h.b16 %v456
  %v836 = vunpack.c.l.b16 %v457
  %v837 = vunpack.c.h.b16 %v457
  %v838 = vunpack.c.l.b16 %v458
  %v839 = vunpack.c.h.b16 %v458
  %v840 = vunpack.c.l.b16 %v459
  %v841 = vunpack.c.h.b16 %v459
  %v842 = vunpack.c.l.b16 %v460
  %v843 = vunpack.c.h.b16 %v460
  %v844 = vunpack.c.l.b16 %v461
  %v845 = vunpack.c.h.b16 %v461
  %v846 = vunpack.c.l.b16 %v462
  %v847 = vunpack.c.h.b16 %v462
  %v848 = vunpack.c.l.b16 %v463
  %v849 = vunpack.c.h.b16 %v463
  %v850 = vunpack.c.l.b16 %v464
  %v851 = vunpack.c.h.b16 %v464
  %v852 = vunpack.c.l.b16 %v465
  %v853 = vunpack.c.h.b16 %v465
  %v854 = vunpack.c.l.b16 %v466
  %v855 = vunpack.c.h.b16 %v466
  %v856 = vunpack.c.l.b16 %v467
  %v857 = vunpack.c.h.b16 %v467
  %v858 = vunpack.c.l.b16 %v468
  %v859 = vunpack.c.h.b16 %v468
  %v860 = vunpack.c.l.b16 %v469
  %v861 = vunpack.c.h.b16 %v469
  %v862 = vunpack.c.l.b16 %v470
  %v863 = vunpack.c.h.b16 %v470
  %v864 = vunpack.c.l.b16 %v471
  %v865 = vunpack.c.h.b16 %v471
  %v866 = vunpack.c.l.b16 %v472
  %v867 = vunpack.c.h.b16 %v472
  %v868 = vunpack.c.l.b16 %v473
  %v869 = vunpack.c.h.b16 %v473
  %v870 = vunpack.c.l.b16 %v474
  %v871 = vunpack.c.h.b16 %v474
  %v872 = vunpack.c.l.b16 %v475
  %v873 = vunpack.c.h.b16 %v475
  %v874 = vunpack.c.l.b16 %v476
  %v875 = vunpack.c.h.b16 %v476
  %v876 = vunpack.c.l.b16 %v477
  %v877 = vunpack.c.h.b16 %v477
  %v878 = vunpack.c.l.b16 %v478
  %v879 = vunpack.c.h.b16 %v478
  %v880 = vunpack.c.l.b16 %v479
  %v881 = vunpack.c.h.b16 %v479
  %v882 = vunpack.c.l.b16 %v480
  %v883 = vunpack.c.h.b16 %v480
  %v884 = vunpack.c.l.b16 %v481
  %v885 = vunpack.c.h.b16 %v481
  %v886 = vunpack.c.l.b16 %v482
  %v887 = vunpack.c.h.b16 %v482
  %v888 = vunpack.c.l.b16 %v483
  %v889 = vunpack.c.h.b16 %v483
  %v890 = vpack.c.b16 %v638, %v634
  %v891 = vpack.c.b16 %v639, %v635
  %v892 = vpack.c.b16 %v640, %v636
  %v893 = vpack.c.b16 %v641, %v637
  %v894 = vpack.c.b16 %v646, %v642
  %v895 = vpack.c.b16 %v647, %v643
  %v896 = vpack.c.b16 %v648, %v644
  %v897 = vpack.c.b16 %v649, %v645
  %v898 = vpack.c.b16 %v654, %v650
  %v899 = vpack.c.b16 %v655, %v651
  %v900 = vpack.c.b16 %v656, %v652
  %v901 = vpack.c.b16 %v657, %v653
  %v902 = vpack.c.b16 %v662, %v658
  %v903 = vpack.c.b16 %v663, %v659
  %v904 = vpack.c.b16 %v664, %v660
  %v905 = vpack.c.b16 %v665, %v661
  %v906 = vpack.c.b16 %v670, %v666
  %v907 = vpack.c.b16 %v671, %v667
  %v908 = vpack.c.b16 %v672, %v668
  %v909 = vpack.c.b16 %v673, %v669
  %v910 = vpack.c.b16 %v678, %v674
  %v911 = vpack.c.b16 %v679, %v675
  %v912 = vpack.c.b16 %v680, %v676
  %v913 = vpack.c.b16 %v681, %v677
  %v914 = vpack.c.b16 %v686, %v682
  %v915 = vpack.c.b16 %v687, %v683
  %v916 = vpack.c.b16 %v688, %v684
  %v917 = vpack.c.b16 %v689, %v685
  %v918 = vpack.c.b16 %v694, %v690
  %v919 = vpack.c.b16 %v695, %v691
  %v920 = vpack.c.b16 %v696, %v692
  %v921 = vpack.c.b16 %v697, %v693
  %v922 = vpack.c.b16 %v702, %v698
  %v923 = vpack.c.b16 %v703, %v699
  %v924 = vpack.c.b16 %v704, %v700
  %v925 = vpack.c.b16 %v705, %v701
  %v926 = vpack.c.b16 %v710, %v706
  %v927 = vpack.c.b16 %v711, %v707
  %v928 = vpack.c.b16 %v712, %v708
  %v929 = vpack.c.b16 %v713, %v709
  %v930 = vpack.c.b16 %v718, %v714
  %v931 = vpack.c.b16 %v719, %v715
  %v932 = vpack.c.b16 %v720, %v716
  %v933 = vpack.c.b16 %v721, %v717
  %v934 = vpack.c.b16 %v726, %v722
  %v935 = vpack.c.b16 %v727, %v723
  %v936 = vpack.c.b16 %v728, %v724
  %v937 = vpack.c.b16 %v729, %v725
  %v938 = vpack.c.b16 %v734, %v730
  %v939 = vpack.c.b16 %v735, %v731
  %v940 = vpack.c.b16 %v736, %v732
  %v941 = vpack.c.b16 %v737, %v733
  %v942 = vpack.c.b16 %v742, %v738
  %v943 = vpack.c.b16 %v743, %v739
  %v944 = vpack.c.b16 %v744, %v740
  %v945 = vpack.c.b16 %v745, %v741
  %v946 = vpack.c.b16 %v750, %v746
  %v947 = vpack.c.b16 %v751, %v747
  %v948 = vpack.c.b16 %v752, %v748
  %v949 = vpack.c.b16 %v753, %v749
  %v950 = vpack.c.b16 %v758, %v754
  %v951 = vpack.c.b16 %v759, %v755
  %v952 = vpack.c.b16 %v760, %v756
  %v953 = vpack.c.b16 %v761, %v757
  %v954 = vpack.c.b16 %v766, %v762
  %v955 = vpack.c.b16 %v767, %v763
  %v956 = vpack.c.b16 %v768, %v764
  %v957 = vpack.c.b16 %v769, %v765
  %v958 = vpack.c.b16 %v774, %v770
  %v959 = vpack.c.b16 %v775, %v771
  %v960 = vpack.c.b16 %v776, %v772
  %v961 = vpack.c.b16 %v777, %v773
  %v962 = vpack.c.b16 %v782, %v778
  %v963 = vpack.c.b16 %v783, %v779
  %v964 = vpack.c.b16 %v784, %v780
  %v965 = vpack.c.b16 %v785, %v781
  %v966 = vpack.c.b16 %v790, %v786
  %v967 = vpack.c.b16 %v791, %v787
  %v968 = vpack.c.b16 %v792, %v788
  %v969 = vpack.c.b16 %v793, %v789
  %v970 = vpack.c.b16 %v798, %v794
  %v971 = vpack.c.b16 %v799, %v795
  %v972 = vpack.c.b16 %v800, %v796
  %v973 = vpack.c.b16 %v801, %v797
  %v974 = vpack.c.b16 %v806, %v802
  %v975 = vpack.c.b16 %v807, %v803
  %v976 = vpack.c.b16 %v808, %v804
  %v977 = vpack.c.b16 %v809, %v805
  %v978 = vpack.c.b16 %v814, %v810
  %v979 = vpack.c.b16 %v815, %v811
  %v980 = vpack.c.b16 %v816, %v812
  %v981 = vpack.c.b16 %v817, %v813
  %v982 = vpack.c.b16 %v822, %v818
  %v983 = vpack.c.b16 %v823, %v819
  %v984 = vpack.c.b16 %v824, %v820
  %v985 = vpack.c.b16 %v825, %v821
  %v986 = vpack.c.b16 %v830, %v826
  %v987 = vpack.c.b16 %v831, %v827
  %v988 = vpack.c.b16 %v832, %v828
  %v989 = vpack.c.b16 %v833, %v829
  %v990 = vpack.c.b16 %v838, %v834
  %v991 = vpack.c.b16 %v839, %v835
  %v992 = vpack.c.b16 %v840, %v836
  %v993 = vpack.c.b16 %v841, %v837
  %v994 = vpack.c.b16 %v846, %v842
  %v995 = vpack.c.b16 %v847, %v843
  %v996 = vpack.c.b16 %v848, %v844
  %v997 = vpack.c.b16 %v849, %v845
  %v998 = vpack.c.b16 %v854, %v850
  %v999 = vpack.c.b16 %v855, %v851
  %v1000 = vpack.c.b16 %v856, %v852
  %v1001 = vpack.c.b16 %v857, %v853
  %v1002 = vpack.c.b16 %v862, %v858
  %v1003 = vpack.c.b16 %v863, %v859
  %v1004 = vpack.c.b16 %v864, %v860
  %v1005 = vpack.c.b16 %v865, %v861
  %v1006 = vpack.c.b16 %v870, %v866
  %v1007 = vpack.c.b16 %v871, %v867
  %v1008 = vpack.c.b16 %v872, %v868
  %v1009 = vpack.c.b16 %v873, %v869
  %v1010 = vpack.c.b16 %v878, %v874
  %v1011 = vpack.c.b16 %v879, %v875
  %v1012 = vpack.c.b16 %v880, %v876
  %v1013 = vpack.c.b16 %v881, %v877
  %v1014 = vpack.c.b16 %v886, %v882
  %v1015 = vpack.c.b16 %v887, %v883
  %v1016 = vpack.c.b16 %v888, %v884
  %v1017 = vpack.c.b16 %v889, %v885
  %1146 = vmatprep.subr.bf16.mxu0 %v891
  %1147 = vmatpush1.bf16.msra.mxu0 %v890
  %1148 = vmatprep.subr.bf16.mxu0 %v895
  %1149 = vmatpush1.bf16.msra.mxu0 %v894
  %1150 = vmatprep.subr.bf16.mxu0 %v899
  %1151 = vmatpush1.bf16.msra.mxu0 %v898
  %1152 = vmatprep.subr.bf16.mxu0 %v903
  %1153 = vmatpush1.bf16.msra.mxu0 %v902
  %1154 = vmatprep.subr.bf16.mxu0 %v907
  %1155 = vmatpush1.bf16.msra.mxu0 %v906
  %1156 = vmatprep.subr.bf16.mxu0 %v911
  %1157 = vmatpush1.bf16.msra.mxu0 %v910
  %1158 = vmatprep.subr.bf16.mxu0 %v915
  %1159 = vmatpush1.bf16.msra.mxu0 %v914
  %1160 = vmatprep.subr.bf16.mxu0 %v919
  %1161 = vmatpush1.bf16.msra.mxu0 %v918
  %1162 = vmatprep.subr.bf16.mxu0 %v923
  %1163 = vmatpush1.bf16.msra.mxu0 %v922
  %1164 = vmatprep.subr.bf16.mxu0 %v927
  %1165 = vmatpush1.bf16.msra.mxu0 %v926
  %1166 = vmatprep.subr.bf16.mxu0 %v931
  %1167 = vmatpush1.bf16.msra.mxu0 %v930
  %1168 = vmatprep.subr.bf16.mxu0 %v935
  %1169 = vmatpush1.bf16.msra.mxu0 %v934
  %1170 = vmatprep.subr.bf16.mxu0 %v939
  %1171 = vmatpush1.bf16.msra.mxu0 %v938
  %1172 = vmatprep.subr.bf16.mxu0 %v943
  %1173 = vmatpush1.bf16.msra.mxu0 %v942
  %1174 = vmatprep.subr.bf16.mxu0 %v947
  %1175 = vmatpush1.bf16.msra.mxu0 %v946
  %1176 = vmatprep.subr.bf16.mxu0 %v951
  %1177 = vmatpush1.bf16.msra.mxu0 %v950
  %1178 = vmatprep.mubr.bf16.mxu0 %v353
  %1179 = vmatmul.mubr.bf16.gmra.mrb[0].mxu0 %v352
  %v1180 = vpop.f32.mrb[0].mxu0
  %v1181 = vadd.f32 %v489, %v1180
  %v1182 = vpop.f32.mrb[0].mxu0
  %v1183 = vadd.f32 %v493, %v1182
  %v1184 = vpop.f32.mrb[0].mxu0
  %v1185 = vpop.f32.mrb[0].mxu0
  %1186 = vdwg.mxu0
  %1187 = vmatprep.subr.bf16.mxu0 %v955
  %1188 = vmatpush1.bf16.msra.mxu0 %v954
  %1189 = vmatprep.subr.bf16.mxu0 %v959
  %1190 = vmatpush1.bf16.msra.mxu0 %v958
  %1191 = vmatprep.subr.bf16.mxu0 %v963
  %1192 = vmatpush1.bf16.msra.mxu0 %v962
  %1193 = vmatprep.subr.bf16.mxu0 %v967
  %1194 = vmatpush1.bf16.msra.mxu0 %v966
  %1195 = vmatprep.subr.bf16.mxu0 %v971
  %1196 = vmatpush1.bf16.msra.mxu0 %v970
  %1197 = vmatprep.subr.bf16.mxu0 %v975
  %1198 = vmatpush1.bf16.msra.mxu0 %v974
  %1199 = vmatprep.subr.bf16.mxu0 %v979
  %1200 = vmatpush1.bf16.msra.mxu0 %v978
  %1201 = vmatprep.subr.bf16.mxu0 %v983
  %1202 = vmatpush1.bf16.msra.mxu0 %v982
  %1203 = vmatprep.subr.bf16.mxu0 %v987
  %1204 = vmatpush1.bf16.msra.mxu0 %v986
  %1205 = vmatprep.subr.bf16.mxu0 %v991
  %1206 = vmatpush1.bf16.msra.mxu0 %v990
  %1207 = vmatprep.subr.bf16.mxu0 %v995
  %1208 = vmatpush1.bf16.msra.mxu0 %v994
  %1209 = vmatprep.subr.bf16.mxu0 %v999
  %1210 = vmatpush1.bf16.msra.mxu0 %v998
  %1211 = vmatprep.subr.bf16.mxu0 %v1003
  %1212 = vmatpush1.bf16.msra.mxu0 %v1002
  %1213 = vmatprep.subr.bf16.mxu0 %v1007
  %1214 = vmatpush1.bf16.msra.mxu0 %v1006
  %1215 = vmatprep.subr.bf16.mxu0 %v1011
  %1216 = vmatpush1.bf16.msra.mxu0 %v1010
  %1217 = vmatprep.subr.bf16.mxu0 %v1015
  %1218 = vmatpush1.bf16.msra.mxu0 %v1014
  %1219 = vmatprep.mubr.bf16.mxu0 %v355
  %1220 = vmatmul.mubr.bf16.gmra.mrb[0].mxu0 %v354
  %v1221 = vpop.f32.mrb[0].mxu0
  %v1222 = vadd.f32 %v1181, %v1221
  %v1223 = vpop.f32.mrb[0].mxu0
  %v1224 = vadd.f32 %v1183, %v1223
  %v1225 = vpop.f32.mrb[0].mxu0
  %v1226 = vpop.f32.mrb[0].mxu0
  %1227 = vdwg.mxu0
  %1228 = vmatprep.subr.bf16.mxu0 %v893
  %1229 = vmatpush1.bf16.msra.mxu0 %v892
  %1230 = vmatprep.subr.bf16.mxu0 %v897
  %1231 = vmatpush1.bf16.msra.mxu0 %v896
  %1232 = vmatprep.subr.bf16.mxu0 %v901
  %1233 = vmatpush1.bf16.msra.mxu0 %v900
  %1234 = vmatprep.subr.bf16.mxu0 %v905
  %1235 = vmatpush1.bf16.msra.mxu0 %v904
  %1236 = vmatprep.subr.bf16.mxu0 %v909
  %1237 = vmatpush1.bf16.msra.mxu0 %v908
  %1238 = vmatprep.subr.bf16.mxu0 %v913
  %1239 = vmatpush1.bf16.msra.mxu0 %v912
  %1240 = vmatprep.subr.bf16.mxu0 %v917
  %1241 = vmatpush1.bf16.msra.mxu0 %v916
  %1242 = vmatprep.subr.bf16.mxu0 %v921
  %1243 = vmatpush1.bf16.msra.mxu0 %v920
  %1244 = vmatprep.subr.bf16.mxu0 %v925
  %1245 = vmatpush1.bf16.msra.mxu0 %v924
  %1246 = vmatprep.subr.bf16.mxu0 %v929
  %1247 = vmatpush1.bf16.msra.mxu0 %v928
  %1248 = vmatprep.subr.bf16.mxu0 %v933
  %1249 = vmatpush1.bf16.msra.mxu0 %v932
  %1250 = vmatprep.subr.bf16.mxu0 %v937
  %1251 = vmatpush1.bf16.msra.mxu0 %v936
  %1252 = vmatprep.subr.bf16.mxu0 %v941
  %1253 = vmatpush1.bf16.msra.mxu0 %v940
  %1254 = vmatprep.subr.bf16.mxu0 %v945
  %1255 = vmatpush1.bf16.msra.mxu0 %v944
  %1256 = vmatprep.subr.bf16.mxu0 %v949
  %1257 = vmatpush1.bf16.msra.mxu0 %v948
  %1258 = vmatprep.subr.bf16.mxu0 %v953
  %1259 = vmatpush1.bf16.msra.mxu0 %v952
  %1260 = vmatprep.mubr.bf16.mxu0 %v353
  %1261 = vmatmul.mubr.bf16.gmra.mrb[0].mxu0 %v352
  %v1262 = vpop.f32.mrb[0].mxu0
  %v1263 = vadd.f32 %v497, %v1262
  %v1264 = vpop.f32.mrb[0].mxu0
  %v1265 = vadd.f32 %v501, %v1264
  %v1266 = vpop.f32.mrb[0].mxu0
  %v1267 = vpop.f32.mrb[0].mxu0
  %1268 = vdwg.mxu0
  %1269 = vmatprep.subr.bf16.mxu0 %v957
  %1270 = vmatpush1.bf16.msra.mxu0 %v956
  %1271 = vmatprep.subr.bf16.mxu0 %v961
  %1272 = vmatpush1.bf16.msra.mxu0 %v960
  %1273 = vmatprep.subr.bf16.mxu0 %v965
  %1274 = vmatpush1.bf16.msra.mxu0 %v964
  %1275 = vmatprep.subr.bf16.mxu0 %v969
  %1276 = vmatpush1.bf16.msra.mxu0 %v968
  %1277 = vmatprep.subr.bf16.mxu0 %v973
  %1278 = vmatpush1.bf16.msra.mxu0 %v972
  %1279 = vmatprep.subr.bf16.mxu0 %v977
  %1280 = vmatpush1.bf16.msra.mxu0 %v976
  %1281 = vmatprep.subr.bf16.mxu0 %v981
  %1282 = vmatpush1.bf16.msra.mxu0 %v980
  %1283 = vmatprep.subr.bf16.mxu0 %v985
  %1284 = vmatpush1.bf16.msra.mxu0 %v984
  %1285 = vmatprep.subr.bf16.mxu0 %v989
  %1286 = vmatpush1.bf16.msra.mxu0 %v988
  %1287 = vmatprep.subr.bf16.mxu0 %v993
  %1288 = vmatpush1.bf16.msra.mxu0 %v992
  %1289 = vmatprep.subr.bf16.mxu0 %v997
  %1290 = vmatpush1.bf16.msra.mxu0 %v996
  %1291 = vmatprep.subr.bf16.mxu0 %v1001
  %1292 = vmatpush1.bf16.msra.mxu0 %v1000
  %1293 = vmatprep.subr.bf16.mxu0 %v1005
  %1294 = vmatpush1.bf16.msra.mxu0 %v1004
  %1295 = vmatprep.subr.bf16.mxu0 %v1009
  %1296 = vmatpush1.bf16.msra.mxu0 %v1008
  %1297 = vmatprep.subr.bf16.mxu0 %v1013
  %1298 = vmatpush1.bf16.msra.mxu0 %v1012
  %1299 = vmatprep.subr.bf16.mxu0 %v1017
  %1300 = vmatpush1.bf16.msra.mxu0 %v1016
  %1301 = vmatprep.mubr.bf16.mxu0 %v355
  %1302 = vmatmul.mubr.bf16.gmra.mrb[0].mxu0 %v354
  %v1303 = vpop.f32.mrb[0].mxu0
  %v1304 = vadd.f32 %v1263, %v1303
  %v1305 = vpop.f32.mrb[0].mxu0
  %v1306 = vadd.f32 %v1265, %v1305
  %v1307 = vpop.f32.mrb[0].mxu0
  %v1308 = vpop.f32.mrb[0].mxu0
  %1309 = vdwg.mxu0
  %v1310 = vmax.f32 %v1222, 0.0
  %v1311 = vmax.f32 %v1224, 0.0
  %v1312 = vmax.f32 %v1304, 0.0
  %v1313 = vmax.f32 %v1306, 0.0
  %v1314 = vpack.c.bf16 %v1310, %v1310
  %v1315 = vpack.c.bf16 %v1311, %v1311
  %v1316 = vpack.c.bf16 %v1312, %v1312
  %v1317 = vpack.c.bf16 %v1313, %v1313
  %v1318 = vld [vmem:[%s5] sm:$0xff]
  %v1319 = vld [vmem:[%s5 + $0x8] sm:$0xf]
  %v1320 = vld [vmem:[%s5 + $0xc] sm:$0xff]
  %v1321 = vld [vmem:[%s5 + $0x14] sm:$0xf]
  %v1322 = vld [vmem:[%s5 + $0x18] sm:$0xff]
  %v1323 = vld [vmem:[%s5 + $0x20] sm:$0xf]
  %v1324 = vld [vmem:[%s5 + $0x24] sm:$0xff]
  %v1325 = vld [vmem:[%s5 + $0x2c] sm:$0xf]
  %v1326 = vld [vmem:[%s5 + $0x30] sm:$0xff]
  %v1327 = vld [vmem:[%s5 + $0x38] sm:$0xf]
  %v1328 = vld [vmem:[%s5 + $0x3c] sm:$0xff]
  %v1329 = vld [vmem:[%s5 + $0x44] sm:$0xf]
  %v1330 = vld [vmem:[%s5 + $0x48] sm:$0xff]
  %v1331 = vld [vmem:[%s5 + $0x50] sm:$0xf]
  %v1332 = vld [vmem:[%s5 + $0x54] sm:$0xff]
  %v1333 = vld [vmem:[%s5 + $0x5c] sm:$0xf]
  %v1334 = vld [vmem:[%s5 + $0x60] sm:$0xff]
  %v1335 = vld [vmem:[%s5 + $0x68] sm:$0xf]
  %v1336 = vld [vmem:[%s5 + $0x6c] sm:$0xff]
  %v1337 = vld [vmem:[%s5 + $0x74] sm:$0xf]
  %v1338 = vld [vmem:[%s5 + $0x78] sm:$0xff]
  %v1339 = vld [vmem:[%s5 + $0x80] sm:$0xf]
  %v1340 = vld [vmem:[%s5 + $0x84] sm:$0xff]
  %v1341 = vld [vmem:[%s5 + $0x8c] sm:$0xf]
  %v1342 = vld [vmem:[%s5 + $0x90] sm:$0xff]
  %v1343 = vld [vmem:[%s5 + $0x98] sm:$0xf]
  %v1344 = vld [vmem:[%s5 + $0x9c] sm:$0xff]
  %v1345 = vld [vmem:[%s5 + $0xa4] sm:$0xf]
  %v1346 = vld [vmem:[%s5 + $0xa8] sm:$0xff]
  %v1347 = vld [vmem:[%s5 + $0xb0] sm:$0xf]
  %v1348 = vld [vmem:[%s5 + $0xb4] sm:$0xff]
  %v1349 = vld [vmem:[%s5 + $0xbc] sm:$0xf]
  %v1350 = vld [vmem:[%s5 + $0xc0] sm:$0xff]
  %v1351 = vld [vmem:[%s5 + $0xc8] sm:$0xf]
  %v1352 = vld [vmem:[%s5 + $0xcc] sm:$0xff]
  %v1353 = vld [vmem:[%s5 + $0xd4] sm:$0xf]
  %v1354 = vld [vmem:[%s5 + $0xd8] sm:$0xff]
  %v1355 = vld [vmem:[%s5 + $0xe0] sm:$0xf]
  %v1356 = vld [vmem:[%s5 + $0xe4] sm:$0xff]
  %v1357 = vld [vmem:[%s5 + $0xec] sm:$0xf]
  %v1358 = vld [vmem:[%s5 + $0xf0] sm:$0xff]
  %v1359 = vld [vmem:[%s5 + $0xf8] sm:$0xf]
  %v1360 = vld [vmem:[%s5 + $0xfc] sm:$0xff]
  %v1361 = vld [vmem:[%s5 + $0x104] sm:$0xf]
  %v1362 = vld [vmem:[%s5 + $0x108] sm:$0xff]
  %v1363 = vld [vmem:[%s5 + $0x110] sm:$0xf]
  %v1364 = vld [vmem:[%s5 + $0x114] sm:$0xff]
  %v1365 = vld [vmem:[%s5 + $0x11c] sm:$0xf]
  %v1366 = vld [vmem:[%s5 + $0x120] sm:$0xff]
  %v1367 = vld [vmem:[%s5 + $0x128] sm:$0xf]
  %v1368 = vld [vmem:[%s5 + $0x12c] sm:$0xff]
  %v1369 = vld [vmem:[%s5 + $0x134] sm:$0xf]
  %v1370 = vld [vmem:[%s5 + $0x138] sm:$0xff]
  %v1371 = vld [vmem:[%s5 + $0x140] sm:$0xf]
  %v1372 = vld [vmem:[%s5 + $0x144] sm:$0xff]
  %v1373 = vld [vmem:[%s5 + $0x14c] sm:$0xf]
  %v1374 = vld [vmem:[%s5 + $0x150] sm:$0xff]
  %v1375 = vld [vmem:[%s5 + $0x158] sm:$0xf]
  %v1376 = vld [vmem:[%s5 + $0x15c] sm:$0xff]
  %v1377 = vld [vmem:[%s5 + $0x164] sm:$0xf]
  %v1378 = vld [vmem:[%s5 + $0x168] sm:$0xff]
  %v1379 = vld [vmem:[%s5 + $0x170] sm:$0xf]
  %v1380 = vld [vmem:[%s5 + $0x174] sm:$0xff]
  %v1381 = vld [vmem:[%s5 + $0x17c] sm:$0xf]
  %v1382 = vld [vmem:[%s5 + $0x180] sm:$0xff]
  %v1383 = vld [vmem:[%s5 + $0x188] sm:$0xf]
  %v1384 = vld [vmem:[%s5 + $0x18c] sm:$0xff]
  %v1385 = vld [vmem:[%s5 + $0x194] sm:$0xf]
  %v1386 = vld [vmem:[%s5 + $0x198] sm:$0xff]
  %v1387 = vld [vmem:[%s5 + $0x1a0] sm:$0xf]
  %v1388 = vld [vmem:[%s5 + $0x1a4] sm:$0xff]
  %v1389 = vld [vmem:[%s5 + $0x1ac] sm:$0xf]
  %v1390 = vld [vmem:[%s5 + $0x1b0] sm:$0xff]
  %v1391 = vld [vmem:[%s5 + $0x1b8] sm:$0xf]
  %v1392 = vld [vmem:[%s5 + $0x1bc] sm:$0xff]
  %v1393 = vld [vmem:[%s5 + $0x1c4] sm:$0xf]
  %v1394 = vld [vmem:[%s5 + $0x1c8] sm:$0xff]
  %v1395 = vld [vmem:[%s5 + $0x1d0] sm:$0xf]
  %v1396 = vld [vmem:[%s5 + $0x1d4] sm:$0xff]
  %v1397 = vld [vmem:[%s5 + $0x1dc] sm:$0xf]
  %v1398 = vld [vmem:[%s5 + $0x1e0] sm:$0xff]
  %v1399 = vld [vmem:[%s5 + $0x1e8] sm:$0xf]
  %v1400 = vld [vmem:[%s5 + $0x1ec] sm:$0xff]
  %v1401 = vld [vmem:[%s5 + $0x1f4] sm:$0xf]
  %v1402 = vld [vmem:[%s5 + $0x1f8] sm:$0xff]
  %v1403 = vld [vmem:[%s5 + $0x200] sm:$0xf]
  %v1404 = vld [vmem:[%s5 + $0x204] sm:$0xff]
  %v1405 = vld [vmem:[%s5 + $0x20c] sm:$0xf]
  %v1406 = vld [vmem:[%s5 + $0x210] sm:$0xff]
  %v1407 = vld [vmem:[%s5 + $0x218] sm:$0xf]
  %v1408 = vld [vmem:[%s5 + $0x21c] sm:$0xff]
  %v1409 = vld [vmem:[%s5 + $0x224] sm:$0xf]
  %v1410 = vld [vmem:[%s5 + $0x228] sm:$0xff]
  %v1411 = vld [vmem:[%s5 + $0x230] sm:$0xf]
  %v1412 = vld [vmem:[%s5 + $0x234] sm:$0xff]
  %v1413 = vld [vmem:[%s5 + $0x23c] sm:$0xf]
  %v1414 = vld [vmem:[%s5 + $0x240] sm:$0xff]
  %v1415 = vld [vmem:[%s5 + $0x248] sm:$0xf]
  %v1416 = vld [vmem:[%s5 + $0x24c] sm:$0xff]
  %v1417 = vld [vmem:[%s5 + $0x254] sm:$0xf]
  %v1418 = vld [vmem:[%s5 + $0x258] sm:$0xff]
  %v1419 = vld [vmem:[%s5 + $0x260] sm:$0xf]
  %v1420 = vld [vmem:[%s5 + $0x264] sm:$0xff]
  %v1421 = vld [vmem:[%s5 + $0x26c] sm:$0xf]
  %v1422 = vld [vmem:[%s5 + $0x270] sm:$0xff]
  %v1423 = vld [vmem:[%s5 + $0x278] sm:$0xf]
  %v1424 = vld [vmem:[%s5 + $0x27c] sm:$0xff]
  %v1425 = vld [vmem:[%s5 + $0x284] sm:$0xf]
  %v1426 = vld [vmem:[%s5 + $0x288] sm:$0xff]
  %v1427 = vld [vmem:[%s5 + $0x290] sm:$0xf]
  %v1428 = vld [vmem:[%s5 + $0x294] sm:$0xff]
  %v1429 = vld [vmem:[%s5 + $0x29c] sm:$0xf]
  %v1430 = vld [vmem:[%s5 + $0x2a0] sm:$0xff]
  %v1431 = vld [vmem:[%s5 + $0x2a8] sm:$0xf]
  %v1432 = vld [vmem:[%s5 + $0x2ac] sm:$0xff]
  %v1433 = vld [vmem:[%s5 + $0x2b4] sm:$0xf]
  %v1434 = vld [vmem:[%s5 + $0x2b8] sm:$0xff]
  %v1435 = vld [vmem:[%s5 + $0x2c0] sm:$0xf]
  %v1436 = vld [vmem:[%s5 + $0x2c4] sm:$0xff]
  %v1437 = vld [vmem:[%s5 + $0x2cc] sm:$0xf]
  %v1438 = vld [vmem:[%s5 + $0x2d0] sm:$0xff]
  %v1439 = vld [vmem:[%s5 + $0x2d8] sm:$0xf]
  %v1440 = vld [vmem:[%s5 + $0x2dc] sm:$0xff]
  %v1441 = vld [vmem:[%s5 + $0x2e4] sm:$0xf]
  %v1442 = vld [vmem:[%s5 + $0x2e8] sm:$0xff]
  %v1443 = vld [vmem:[%s5 + $0x2f0] sm:$0xf]
  %v1444 = vld [vmem:[%s5 + $0x2f4] sm:$0xff]
  %v1445 = vld [vmem:[%s5 + $0x2fc] sm:$0xf]
  %v1446 = vld [vmem:[%s6] sm:$0x7]
  %v1448 = vlaneseq
  %v1449 = vshrl.u32 %v1448, 7
  %v1450 = vsub.s32 0, %v1449
  %v1451 = vrot.slane %v1446, %v1450
  %v1452 = vlaneseq
  %v1453 = vshrl.u32 %v1452, 7
  %v1454 = vsub.s32 1, %v1453
  %v1455 = vrot.slane %v1446, %v1454
  %v1456 = vlaneseq
  %v1457 = vshrl.u32 %v1456, 7
  %v1458 = vsub.s32 2, %v1457
  %v1459 = vrot.slane %v1446, %v1458
  %v1591 = vunpack.c.l.b16 %v1318
  %v1592 = vunpack.c.h.b16 %v1318
  %v1593 = vunpack.c.l.b16 %v1319
  %v1594 = vunpack.c.l.b16 %v1320
  %v1595 = vunpack.c.h.b16 %v1320
  %v1596 = vunpack.c.l.b16 %v1321
  %v1597 = vunpack.c.l.b16 %v1322
  %v1598 = vunpack.c.h.b16 %v1322
  %v1599 = vunpack.c.l.b16 %v1323
  %v1600 = vunpack.c.l.b16 %v1324
  %v1601 = vunpack.c.h.b16 %v1324
  %v1602 = vunpack.c.l.b16 %v1325
  %v1603 = vunpack.c.l.b16 %v1326
  %v1604 = vunpack.c.h.b16 %v1326
  %v1605 = vunpack.c.l.b16 %v1327
  %v1606 = vunpack.c.l.b16 %v1328
  %v1607 = vunpack.c.h.b16 %v1328
  %v1608 = vunpack.c.l.b16 %v1329
  %v1609 = vunpack.c.l.b16 %v1330
  %v1610 = vunpack.c.h.b16 %v1330
  %v1611 = vunpack.c.l.b16 %v1331
  %v1612 = vunpack.c.l.b16 %v1332
  %v1613 = vunpack.c.h.b16 %v1332
  %v1614 = vunpack.c.l.b16 %v1333
  %v1615 = vunpack.c.l.b16 %v1334
  %v1616 = vunpack.c.h.b16 %v1334
  %v1617 = vunpack.c.l.b16 %v1335
  %v1618 = vunpack.c.l.b16 %v1336
  %v1619 = vunpack.c.h.b16 %v1336
  %v1620 = vunpack.c.l.b16 %v1337
  %v1621 = vunpack.c.l.b16 %v1338
  %v1622 = vunpack.c.h.b16 %v1338
  %v1623 = vunpack.c.l.b16 %v1339
  %v1624 = vunpack.c.l.b16 %v1340
  %v1625 = vunpack.c.h.b16 %v1340
  %v1626 = vunpack.c.l.b16 %v1341
  %v1627 = vunpack.c.l.b16 %v1342
  %v1628 = vunpack.c.h.b16 %v1342
  %v1629 = vunpack.c.l.b16 %v1343
  %v1630 = vunpack.c.l.b16 %v1344
  %v1631 = vunpack.c.h.b16 %v1344
  %v1632 = vunpack.c.l.b16 %v1345
  %v1633 = vunpack.c.l.b16 %v1346
  %v1634 = vunpack.c.h.b16 %v1346
  %v1635 = vunpack.c.l.b16 %v1347
  %v1636 = vunpack.c.l.b16 %v1348
  %v1637 = vunpack.c.h.b16 %v1348
  %v1638 = vunpack.c.l.b16 %v1349
  %v1639 = vunpack.c.l.b16 %v1350
  %v1640 = vunpack.c.h.b16 %v1350
  %v1641 = vunpack.c.l.b16 %v1351
  %v1642 = vunpack.c.l.b16 %v1352
  %v1643 = vunpack.c.h.b16 %v1352
  %v1644 = vunpack.c.l.b16 %v1353
  %v1645 = vunpack.c.l.b16 %v1354
  %v1646 = vunpack.c.h.b16 %v1354
  %v1647 = vunpack.c.l.b16 %v1355
  %v1648 = vunpack.c.l.b16 %v1356
  %v1649 = vunpack.c.h.b16 %v1356
  %v1650 = vunpack.c.l.b16 %v1357
  %v1651 = vunpack.c.l.b16 %v1358
  %v1652 = vunpack.c.h.b16 %v1358
  %v1653 = vunpack.c.l.b16 %v1359
  %v1654 = vunpack.c.l.b16 %v1360
  %v1655 = vunpack.c.h.b16 %v1360
  %v1656 = vunpack.c.l.b16 %v1361
  %v1657 = vunpack.c.l.b16 %v1362
  %v1658 = vunpack.c.h.b16 %v1362
  %v1659 = vunpack.c.l.b16 %v1363
  %v1660 = vunpack.c.l.b16 %v1364
  %v1661 = vunpack.c.h.b16 %v1364
  %v1662 = vunpack.c.l.b16 %v1365
  %v1663 = vunpack.c.l.b16 %v1366
  %v1664 = vunpack.c.h.b16 %v1366
  %v1665 = vunpack.c.l.b16 %v1367
  %v1666 = vunpack.c.l.b16 %v1368
  %v1667 = vunpack.c.h.b16 %v1368
  %v1668 = vunpack.c.l.b16 %v1369
  %v1669 = vunpack.c.l.b16 %v1370
  %v1670 = vunpack.c.h.b16 %v1370
  %v1671 = vunpack.c.l.b16 %v1371
  %v1672 = vunpack.c.l.b16 %v1372
  %v1673 = vunpack.c.h.b16 %v1372
  %v1674 = vunpack.c.l.b16 %v1373
  %v1675 = vunpack.c.l.b16 %v1374
  %v1676 = vunpack.c.h.b16 %v1374
  %v1677 = vunpack.c.l.b16 %v1375
  %v1678 = vunpack.c.l.b16 %v1376
  %v1679 = vunpack.c.h.b16 %v1376
  %v1680 = vunpack.c.l.b16 %v1377
  %v1681 = vunpack.c.l.b16 %v1378
  %v1682 = vunpack.c.h.b16 %v1378
  %v1683 = vunpack.c.l.b16 %v1379
  %v1684 = vunpack.c.l.b16 %v1380
  %v1685 = vunpack.c.h.b16 %v1380
  %v1686 = vunpack.c.l.b16 %v1381
  %v1687 = vunpack.c.l.b16 %v1382
  %v1688 = vunpack.c.h.b16 %v1382
  %v1689 = vunpack.c.l.b16 %v1383
  %v1690 = vunpack.c.l.b16 %v1384
  %v1691 = vunpack.c.h.b16 %v1384
  %v1692 = vunpack.c.l.b16 %v1385
  %v1693 = vunpack.c.l.b16 %v1386
  %v1694 = vunpack.c.h.b16 %v1386
  %v1695 = vunpack.c.l.b16 %v1387
  %v1696 = vunpack.c.l.b16 %v1388
  %v1697 = vunpack.c.h.b16 %v1388
  %v1698 = vunpack.c.l.b16 %v1389
  %v1699 = vunpack.c.l.b16 %v1390
  %v1700 = vunpack.c.h.b16 %v1390
  %v1701 = vunpack.c.l.b16 %v1391
  %v1702 = vunpack.c.l.b16 %v1392
  %v1703 = vunpack.c.h.b16 %v1392
  %v1704 = vunpack.c.l.b16 %v1393
  %v1705 = vunpack.c.l.b16 %v1394
  %v1706 = vunpack.c.h.b16 %v1394
  %v1707 = vunpack.c.l.b16 %v1395
  %v1708 = vunpack.c.l.b16 %v1396
  %v1709 = vunpack.c.h.b16 %v1396
  %v1710 = vunpack.c.l.b16 %v1397
  %v1711 = vunpack.c.l.b16 %v1398
  %v1712 = vunpack.c.h.b16 %v1398
  %v1713 = vunpack.c.l.b16 %v1399
  %v1714 = vunpack.c.l.b16 %v1400
  %v1715 = vunpack.c.h.b16 %v1400
  %v1716 = vunpack.c.l.b16 %v1401
  %v1717 = vunpack.c.l.b16 %v1402
  %v1718 = vunpack.c.h.b16 %v1402
  %v1719 = vunpack.c.l.b16 %v1403
  %v1720 = vunpack.c.l.b16 %v1404
  %v1721 = vunpack.c.h.b16 %v1404
  %v1722 = vunpack.c.l.b16 %v1405
  %v1723 = vunpack.c.l.b16 %v1406
  %v1724 = vunpack.c.h.b16 %v1406
  %v1725 = vunpack.c.l.b16 %v1407
  %v1726 = vunpack.c.l.b16 %v1408
  %v1727 = vunpack.c.h.b16 %v1408
  %v1728 = vunpack.c.l.b16 %v1409
  %v1729 = vunpack.c.l.b16 %v1410
  %v1730 = vunpack.c.h.b16 %v1410
  %v1731 = vunpack.c.l.b16 %v1411
  %v1732 = vunpack.c.l.b16 %v1412
  %v1733 = vunpack.c.h.b16 %v1412
  %v1734 = vunpack.c.l.b16 %v1413
  %v1735 = vunpack.c.l.b16 %v1414
  %v1736 = vunpack.c.h.b16 %v1414
  %v1737 = vunpack.c.l.b16 %v1415
  %v1738 = vunpack.c.l.b16 %v1416
  %v1739 = vunpack.c.h.b16 %v1416
  %v1740 = vunpack.c.l.b16 %v1417
  %v1741 = vunpack.c.l.b16 %v1418
  %v1742 = vunpack.c.h.b16 %v1418
  %v1743 = vunpack.c.l.b16 %v1419
  %v1744 = vunpack.c.l.b16 %v1420
  %v1745 = vunpack.c.h.b16 %v1420
  %v1746 = vunpack.c.l.b16 %v1421
  %v1747 = vunpack.c.l.b16 %v1422
  %v1748 = vunpack.c.h.b16 %v1422
  %v1749 = vunpack.c.l.b16 %v1423
  %v1750 = vunpack.c.l.b16 %v1424
  %v1751 = vunpack.c.h.b16 %v1424
  %v1752 = vunpack.c.l.b16 %v1425
  %v1753 = vunpack.c.l.b16 %v1426
  %v1754 = vunpack.c.h.b16 %v1426
  %v1755 = vunpack.c.l.b16 %v1427
  %v1756 = vunpack.c.l.b16 %v1428
  %v1757 = vunpack.c.h.b16 %v1428
  %v1758 = vunpack.c.l.b16 %v1429
  %v1759 = vunpack.c.l.b16 %v1430
  %v1760 = vunpack.c.h.b16 %v1430
  %v1761 = vunpack.c.l.b16 %v1431
  %v1762 = vunpack.c.l.b16 %v1432
  %v1763 = vunpack.c.h.b16 %v1432
  %v1764 = vunpack.c.l.b16 %v1433
  %v1765 = vunpack.c.l.b16 %v1434
  %v1766 = vunpack.c.h.b16 %v1434
  %v1767 = vunpack.c.l.b16 %v1435
  %v1768 = vunpack.c.l.b16 %v1436
  %v1769 = vunpack.c.h.b16 %v1436
  %v1770 = vunpack.c.l.b16 %v1437
  %v1771 = vunpack.c.l.b16 %v1438
  %v1772 = vunpack.c.h.b16 %v1438
  %v1773 = vunpack.c.l.b16 %v1439
  %v1774 = vunpack.c.l.b16 %v1440
  %v1775 = vunpack.c.h.b16 %v1440
  %v1776 = vunpack.c.l.b16 %v1441
  %v1777 = vunpack.c.l.b16 %v1442
  %v1778 = vunpack.c.h.b16 %v1442
  %v1779 = vunpack.c.l.b16 %v1443
  %v1780 = vunpack.c.l.b16 %v1444
  %v1781 = vunpack.c.h.b16 %v1444
  %v1782 = vunpack.c.l.b16 %v1445
  %v1783 = vpack.c.b16 %v1594, %v1591
  %v1784 = vpack.c.b16 %v1595, %v1592
  %v1785 = vpack.c.b16 %v1596, %v1593
  %v1786 = vpack.c.b16 %v1600, %v1597
  %v1787 = vpack.c.b16 %v1601, %v1598
  %v1788 = vpack.c.b16 %v1602, %v1599
  %v1789 = vpack.c.b16 %v1606, %v1603
  %v1790 = vpack.c.b16 %v1607, %v1604
  %v1791 = vpack.c.b16 %v1608, %v1605
  %v1792 = vpack.c.b16 %v1612, %v1609
  %v1793 = vpack.c.b16 %v1613, %v1610
  %v1794 = vpack.c.b16 %v1614, %v1611
  %v1795 = vpack.c.b16 %v1618, %v1615
  %v1796 = vpack.c.b16 %v1619, %v1616
  %v1797 = vpack.c.b16 %v1620, %v1617
  %v1798 = vpack.c.b16 %v1624, %v1621
  %v1799 = vpack.c.b16 %v1625, %v1622
  %v1800 = vpack.c.b16 %v1626, %v1623
  %v1801 = vpack.c.b16 %v1630, %v1627
  %v1802 = vpack.c.b16 %v1631, %v1628
  %v1803 = vpack.c.b16 %v1632, %v1629
  %v1804 = vpack.c.b16 %v1636, %v1633
  %v1805 = vpack.c.b16 %v1637, %v1634
  %v1806 = vpack.c.b16 %v1638, %v1635
  %v1807 = vpack.c.b16 %v1642, %v1639
  %v1808 = vpack.c.b16 %v1643, %v1640
  %v1809 = vpack.c.b16 %v1644, %v1641
  %v1810 = vpack.c.b16 %v1648, %v1645
  %v1811 = vpack.c.b16 %v1649, %v1646
  %v1812 = vpack.c.b16 %v1650, %v1647
  %v1813 = vpack.c.b16 %v1654, %v1651
  %v1814 = vpack.c.b16 %v1655, %v1652
  %v1815 = vpack.c.b16 %v1656, %v1653
  %v1816 = vpack.c.b16 %v1660, %v1657
  %v1817 = vpack.c.b16 %v1661, %v1658
  %v1818 = vpack.c.b16 %v1662, %v1659
  %v1819 = vpack.c.b16 %v1666, %v1663
  %v1820 = vpack.c.b16 %v1667, %v1664
  %v1821 = vpack.c.b16 %v1668, %v1665
  %v1822 = vpack.c.b16 %v1672, %v1669
  %v1823 = vpack.c.b16 %v1673, %v1670
  %v1824 = vpack.c.b16 %v1674, %v1671
  %v1825 = vpack.c.b16 %v1678, %v1675
  %v1826 = vpack.c.b16 %v1679, %v1676
  %v1827 = vpack.c.b16 %v1680, %v1677
  %v1828 = vpack.c.b16 %v1684, %v1681
  %v1829 = vpack.c.b16 %v1685, %v1682
  %v1830 = vpack.c.b16 %v1686, %v1683
  %v1831 = vpack.c.b16 %v1690, %v1687
  %v1832 = vpack.c.b16 %v1691, %v1688
  %v1833 = vpack.c.b16 %v1692, %v1689
  %v1834 = vpack.c.b16 %v1696, %v1693
  %v1835 = vpack.c.b16 %v1697, %v1694
  %v1836 = vpack.c.b16 %v1698, %v1695
  %v1837 = vpack.c.b16 %v1702, %v1699
  %v1838 = vpack.c.b16 %v1703, %v1700
  %v1839 = vpack.c.b16 %v1704, %v1701
  %v1840 = vpack.c.b16 %v1708, %v1705
  %v1841 = vpack.c.b16 %v1709, %v1706
  %v1842 = vpack.c.b16 %v1710, %v1707
  %v1843 = vpack.c.b16 %v1714, %v1711
  %v1844 = vpack.c.b16 %v1715, %v1712
  %v1845 = vpack.c.b16 %v1716, %v1713
  %v1846 = vpack.c.b16 %v1720, %v1717
  %v1847 = vpack.c.b16 %v1721, %v1718
  %v1848 = vpack.c.b16 %v1722, %v1719
  %v1849 = vpack.c.b16 %v1726, %v1723
  %v1850 = vpack.c.b16 %v1727, %v1724
  %v1851 = vpack.c.b16 %v1728, %v1725
  %v1852 = vpack.c.b16 %v1732, %v1729
  %v1853 = vpack.c.b16 %v1733, %v1730
  %v1854 = vpack.c.b16 %v1734, %v1731
  %v1855 = vpack.c.b16 %v1738, %v1735
  %v1856 = vpack.c.b16 %v1739, %v1736
  %v1857 = vpack.c.b16 %v1740, %v1737
  %v1858 = vpack.c.b16 %v1744, %v1741
  %v1859 = vpack.c.b16 %v1745, %v1742
  %v1860 = vpack.c.b16 %v1746, %v1743
  %v1861 = vpack.c.b16 %v1750, %v1747
  %v1862 = vpack.c.b16 %v1751, %v1748
  %v1863 = vpack.c.b16 %v1752, %v1749
  %v1864 = vpack.c.b16 %v1756, %v1753
  %v1865 = vpack.c.b16 %v1757, %v1754
  %v1866 = vpack.c.b16 %v1758, %v1755
  %v1867 = vpack.c.b16 %v1762, %v1759
  %v1868 = vpack.c.b16 %v1763, %v1760
  %v1869 = vpack.c.b16 %v1764, %v1761
  %v1870 = vpack.c.b16 %v1768, %v1765
  %v1871 = vpack.c.b16 %v1769, %v1766
  %v1872 = vpack.c.b16 %v1770, %v1767
  %v1873 = vpack.c.b16 %v1774, %v1771
  %v1874 = vpack.c.b16 %v1775, %v1772
  %v1875 = vpack.c.b16 %v1776, %v1773
  %v1876 = vpack.c.b16 %v1780, %v1777
  %v1877 = vpack.c.b16 %v1781, %v1778
  %v1878 = vpack.c.b16 %v1782, %v1779
  %1975 = vmatprep.subr.bf16.mxu0 %v1784
  %1976 = vmatpush1.bf16.msra.mxu0 %v1783
  %1977 = vmatprep.subr.bf16.mxu0 %v1787
  %1978 = vmatpush1.bf16.msra.mxu0 %v1786
  %1979 = vmatprep.subr.bf16.mxu0 %v1790
  %1980 = vmatpush1.bf16.msra.mxu0 %v1789
  %1981 = vmatprep.subr.bf16.mxu0 %v1793
  %1982 = vmatpush1.bf16.msra.mxu0 %v1792
  %1983 = vmatprep.subr.bf16.mxu0 %v1796
  %1984 = vmatpush1.bf16.msra.mxu0 %v1795
  %1985 = vmatprep.subr.bf16.mxu0 %v1799
  %1986 = vmatpush1.bf16.msra.mxu0 %v1798
  %1987 = vmatprep.subr.bf16.mxu0 %v1802
  %1988 = vmatpush1.bf16.msra.mxu0 %v1801
  %1989 = vmatprep.subr.bf16.mxu0 %v1805
  %1990 = vmatpush1.bf16.msra.mxu0 %v1804
  %1991 = vmatprep.subr.bf16.mxu0 %v1808
  %1992 = vmatpush1.bf16.msra.mxu0 %v1807
  %1993 = vmatprep.subr.bf16.mxu0 %v1811
  %1994 = vmatpush1.bf16.msra.mxu0 %v1810
  %1995 = vmatprep.subr.bf16.mxu0 %v1814
  %1996 = vmatpush1.bf16.msra.mxu0 %v1813
  %1997 = vmatprep.subr.bf16.mxu0 %v1817
  %1998 = vmatpush1.bf16.msra.mxu0 %v1816
  %1999 = vmatprep.subr.bf16.mxu0 %v1820
  %2000 = vmatpush1.bf16.msra.mxu0 %v1819
  %2001 = vmatprep.subr.bf16.mxu0 %v1823
  %2002 = vmatpush1.bf16.msra.mxu0 %v1822
  %2003 = vmatprep.subr.bf16.mxu0 %v1826
  %2004 = vmatpush1.bf16.msra.mxu0 %v1825
  %2005 = vmatprep.subr.bf16.mxu0 %v1829
  %2006 = vmatpush1.bf16.msra.mxu0 %v1828
  %2007 = vmatprep.mubr.bf16.mxu0 %v1315
  %2008 = vmatmul.mubr.bf16.gmra.mrb[0].mxu0 %v1314
  %v2009 = vpop.f32.mrb[0].mxu0
  %v2010 = vadd.f32 %v1451, %v2009
  %v2011 = vpop.f32.mrb[0].mxu0
  %v2012 = vadd.f32 %v1455, %v2011
  %v2013 = vpop.f32.mrb[0].mxu0
  %v2014 = vpop.f32.mrb[0].mxu0
  %2015 = vdwg.mxu0
  %2016 = vmatprep.subr.bf16.mxu0 %v1832
  %2017 = vmatpush1.bf16.msra.mxu0 %v1831
  %2018 = vmatprep.subr.bf16.mxu0 %v1835
  %2019 = vmatpush1.bf16.msra.mxu0 %v1834
  %2020 = vmatprep.subr.bf16.mxu0 %v1838
  %2021 = vmatpush1.bf16.msra.mxu0 %v1837
  %2022 = vmatprep.subr.bf16.mxu0 %v1841
  %2023 = vmatpush1.bf16.msra.mxu0 %v1840
  %2024 = vmatprep.subr.bf16.mxu0 %v1844
  %2025 = vmatpush1.bf16.msra.mxu0 %v1843
  %2026 = vmatprep.subr.bf16.mxu0 %v1847
  %2027 = vmatpush1.bf16.msra.mxu0 %v1846
  %2028 = vmatprep.subr.bf16.mxu0 %v1850
  %2029 = vmatpush1.bf16.msra.mxu0 %v1849
  %2030 = vmatprep.subr.bf16.mxu0 %v1853
  %2031 = vmatpush1.bf16.msra.mxu0 %v1852
  %2032 = vmatprep.subr.bf16.mxu0 %v1856
  %2033 = vmatpush1.bf16.msra.mxu0 %v1855
  %2034 = vmatprep.subr.bf16.mxu0 %v1859
  %2035 = vmatpush1.bf16.msra.mxu0 %v1858
  %2036 = vmatprep.subr.bf16.mxu0 %v1862
  %2037 = vmatpush1.bf16.msra.mxu0 %v1861
  %2038 = vmatprep.subr.bf16.mxu0 %v1865
  %2039 = vmatpush1.bf16.msra.mxu0 %v1864
  %2040 = vmatprep.subr.bf16.mxu0 %v1868
  %2041 = vmatpush1.bf16.msra.mxu0 %v1867
  %2042 = vmatprep.subr.bf16.mxu0 %v1871
  %2043 = vmatpush1.bf16.msra.mxu0 %v1870
  %2044 = vmatprep.subr.bf16.mxu0 %v1874
  %2045 = vmatpush1.bf16.msra.mxu0 %v1873
  %2046 = vmatprep.subr.bf16.mxu0 %v1877
  %2047 = vmatpush1.bf16.msra.mxu0 %v1876
  %2048 = vmatprep.mubr.bf16.mxu0 %v1317
  %2049 = vmatmul.mubr.bf16.gmra.mrb[0].mxu0 %v1316
  %v2050 = vpop.f32.mrb[0].mxu0
  %v2051 = vadd.f32 %v2010, %v2050
  %v2052 = vpop.f32.mrb[0].mxu0
  %v2053 = vadd.f32 %v2012, %v2052
  %v2054 = vpop.f32.mrb[0].mxu0
  %v2055 = vpop.f32.mrb[0].mxu0
  %2056 = vdwg.mxu0
  %2057 = vmatprep.subr.bf16.mxu0 0
  %2058 = vmatpush1.bf16.msra.mxu0 %v1785
  %2059 = vmatprep.subr.bf16.mxu0 0
  %2060 = vmatpush1.bf16.msra.mxu0 %v1788
  %2061 = vmatprep.subr.bf16.mxu0 0
  %2062 = vmatpush1.bf16.msra.mxu0 %v1791
  %2063 = vmatprep.subr.bf16.mxu0 0
  %2064 = vmatpush1.bf16.msra.mxu0 %v1794
  %2065 = vmatprep.subr.bf16.mxu0 0
  %2066 = vmatpush1.bf16.msra.mxu0 %v1797
  %2067 = vmatprep.subr.bf16.mxu0 0
  %2068 = vmatpush1.bf16.msra.mxu0 %v1800
  %2069 = vmatprep.subr.bf16.mxu0 0
  %2070 = vmatpush1.bf16.msra.mxu0 %v1803
  %2071 = vmatprep.subr.bf16.mxu0 0
  %2072 = vmatpush1.bf16.msra.mxu0 %v1806
  %2073 = vmatprep.subr.bf16.mxu0 0
  %2074 = vmatpush1.bf16.msra.mxu0 %v1809
  %2075 = vmatprep.subr.bf16.mxu0 0
  %2076 = vmatpush1.bf16.msra.mxu0 %v1812
  %2077 = vmatprep.subr.bf16.mxu0 0
  %2078 = vmatpush1.bf16.msra.mxu0 %v1815
  %2079 = vmatprep.subr.bf16.mxu0 0
  %2080 = vmatpush1.bf16.msra.mxu0 %v1818
  %2081 = vmatprep.subr.bf16.mxu0 0
  %2082 = vmatpush1.bf16.msra.mxu0 %v1821
  %2083 = vmatprep.subr.bf16.mxu0 0
  %2084 = vmatpush1.bf16.msra.mxu0 %v1824
  %2085 = vmatprep.subr.bf16.mxu0 0
  %2086 = vmatpush1.bf16.msra.mxu0 %v1827
  %2087 = vmatprep.subr.bf16.mxu0 0
  %2088 = vmatpush1.bf16.msra.mxu0 %v1830
  %2089 = vmatprep.mubr.bf16.mxu0 %v1315
  %2090 = vmatmul.mubr.bf16.gmra.mrb[0].mxu0 %v1314
  %v2091 = vpop.f32.mrb[0].mxu0
  %v2092 = vadd.f32 %v1459, %v2091
  %v2093 = vpop.f32.mrb[0].mxu0
  %v2094 = vpop.f32.mrb[0].mxu0
  %v2095 = vpop.f32.mrb[0].mxu0
  %2096 = vdwg.mxu0
  %2097 = vmatprep.subr.bf16.mxu0 0
  %2098 = vmatpush1.bf16.msra.mxu0 %v1833
  %2099 = vmatprep.subr.bf16.mxu0 0
  %2100 = vmatpush1.bf16.msra.mxu0 %v1836
  %2101 = vmatprep.subr.bf16.mxu0 0
  %2102 = vmatpush1.bf16.msra.mxu0 %v1839
  %2103 = vmatprep.subr.bf16.mxu0 0
  %2104 = vmatpush1.bf16.msra.mxu0 %v1842
  %2105 = vmatprep.subr.bf16.mxu0 0
  %2106 = vmatpush1.bf16.msra.mxu0 %v1845
  %2107 = vmatprep.subr.bf16.mxu0 0
  %2108 = vmatpush1.bf16.msra.mxu0 %v1848
  %2109 = vmatprep.subr.bf16.mxu0 0
  %2110 = vmatpush1.bf16.msra.mxu0 %v1851
  %2111 = vmatprep.subr.bf16.mxu0 0
  %2112 = vmatpush1.bf16.msra.mxu0 %v1854
  %2113 = vmatprep.subr.bf16.mxu0 0
  %2114 = vmatpush1.bf16.msra.mxu0 %v1857
  %2115 = vmatprep.subr.bf16.mxu0 0
  %2116 = vmatpush1.bf16.msra.mxu0 %v1860
  %2117 = vmatprep.subr.bf16.mxu0 0
  %2118 = vmatpush1.bf16.msra.mxu0 %v1863
  %2119 = vmatprep.subr.bf16.mxu0 0
  %2120 = vmatpush1.bf16.msra.mxu0 %v1866
  %2121 = vmatprep.subr.bf16.mxu0 0
  %2122 = vmatpush1.bf16.msra.mxu0 %v1869
  %2123 = vmatprep.subr.bf16.mxu0 0
  %2124 = vmatpush1.bf16.msra.mxu0 %v1872
  %2125 = vmatprep.subr.bf16.mxu0 0
  %2126 = vmatpush1.bf16.msra.mxu0 %v1875
  %2127 = vmatprep.subr.bf16.mxu0 0
  %2128 = vmatpush1.bf16.msra.mxu0 %v1878
  %2129 = vmatprep.mubr.bf16.mxu0 %v1317
  %2130 = vmatmul.mubr.bf16.gmra.mrb[0].mxu0 %v1316
  %v2131 = vpop.f32.mrb[0].mxu0
  %v2132 = vadd.f32 %v2092, %v2131
  %v2133 = vpop.f32.mrb[0].mxu0
  %v2134 = vpop.f32.mrb[0].mxu0
  %v2135 = vpop.f32.mrb[0].mxu0
  %2136 = vdwg.mxu0
  %v2137 = vmax.f32 %v2051, 0.0
  %v2138 = vmax.f32 %v2053, 0.0
  %v2139 = vmax.f32 %v2132, 0.0
  %v2140 = vpack.c.bf16 %v2137, %v2137
  %v2141 = vpack.c.bf16 %v2138, %v2138
  %v2142 = vpack.c.bf16 %v2139, %v2139
  %v2143 = vld [vmem:[%s7] sm:$0xff]
  %v2144 = vld [vmem:[%s7 + $0x8] sm:$0xff]
  %v2145 = vld [vmem:[%s7 + $0x10] sm:$0xff]
  %v2146 = vld [vmem:[%s7 + $0x18] sm:$0xff]
  %v2147 = vld [vmem:[%s7 + $0x20] sm:$0xff]
  %v2148 = vld [vmem:[%s7 + $0x28] sm:$0xff]
  %v2149 = vld [vmem:[%s7 + $0x30] sm:$0xff]
  %v2150 = vld [vmem:[%s7 + $0x38] sm:$0xff]
  %v2151 = vld [vmem:[%s7 + $0x40] sm:$0xff]
  %v2152 = vld [vmem:[%s7 + $0x48] sm:$0xff]
  %v2153 = vld [vmem:[%s7 + $0x50] sm:$0xff]
  %v2154 = vld [vmem:[%s7 + $0x58] sm:$0xff]
  %v2155 = vld [vmem:[%s7 + $0x60] sm:$0xff]
  %v2156 = vld [vmem:[%s7 + $0x68] sm:$0xff]
  %v2157 = vld [vmem:[%s7 + $0x70] sm:$0xff]
  %v2158 = vld [vmem:[%s7 + $0x78] sm:$0xff]
  %v2159 = vld [vmem:[%s7 + $0x80] sm:$0xff]
  %v2160 = vld [vmem:[%s7 + $0x88] sm:$0xff]
  %v2161 = vld [vmem:[%s7 + $0x90] sm:$0xff]
  %v2162 = vld [vmem:[%s7 + $0x98] sm:$0xff]
  %v2163 = vld [vmem:[%s7 + $0xa0] sm:$0xff]
  %v2164 = vld [vmem:[%s7 + $0xa8] sm:$0xff]
  %v2165 = vld [vmem:[%s7 + $0xb0] sm:$0xff]
  %v2166 = vld [vmem:[%s7 + $0xb8] sm:$0xff]
  %v2167 = vld [vmem:[%s7 + $0xc0] sm:$0xff]
  %v2168 = vld [vmem:[%s7 + $0xc8] sm:$0xff]
  %v2169 = vld [vmem:[%s7 + $0xd0] sm:$0xff]
  %v2170 = vld [vmem:[%s7 + $0xd8] sm:$0xff]
  %v2171 = vld [vmem:[%s7 + $0xe0] sm:$0xff]
  %v2172 = vld [vmem:[%s7 + $0xe8] sm:$0xff]
  %v2173 = vld [vmem:[%s7 + $0xf0] sm:$0xff]
  %v2174 = vld [vmem:[%s7 + $0xf8] sm:$0xff]
  %v2175 = vld [vmem:[%s7 + $0x100] sm:$0xff]
  %v2176 = vld [vmem:[%s7 + $0x108] sm:$0xff]
  %v2177 = vld [vmem:[%s7 + $0x110] sm:$0xff]
  %v2178 = vld [vmem:[%s7 + $0x118] sm:$0xff]
  %v2179 = vld [vmem:[%s7 + $0x120] sm:$0xff]
  %v2180 = vld [vmem:[%s7 + $0x128] sm:$0xff]
  %v2181 = vld [vmem:[%s7 + $0x130] sm:$0xff]
  %v2182 = vld [vmem:[%s7 + $0x138] sm:$0xff]
  %v2183 = vld [vmem:[%s7 + $0x140] sm:$0xff]
  %v2184 = vld [vmem:[%s7 + $0x148] sm:$0xff]
  %v2185 = vld [vmem:[%s7 + $0x150] sm:$0xff]
  %v2186 = vld [vmem:[%s7 + $0x158] sm:$0xff]
  %v2187 = vld [vmem:[%s7 + $0x160] sm:$0xff]
  %v2188 = vld [vmem:[%s7 + $0x168] sm:$0xff]
  %v2189 = vld [vmem:[%s7 + $0x170] sm:$0xff]
  %v2190 = vld [vmem:[%s7 + $0x178] sm:$0xff]
  %v2191 = vld [vmem:[%s8] sm:$0x3]
  %v2193 = vlaneseq
  %v2194 = vshrl.u32 %v2193, 7
  %v2195 = vsub.s32 0, %v2194
  %v2196 = vrot.slane %v2191, %v2195
  %v2197 = vlaneseq
  %v2198 = vshrl.u32 %v2197, 7
  %v2199 = vsub.s32 1, %v2198
  %v2200 = vrot.slane %v2191, %v2199
  %v2251 = vunpack.c.l.b16 %v2143
  %v2252 = vunpack.c.h.b16 %v2143
  %v2253 = vunpack.c.l.b16 %v2144
  %v2254 = vunpack.c.h.b16 %v2144
  %v2255 = vunpack.c.l.b16 %v2145
  %v2256 = vunpack.c.h.b16 %v2145
  %v2257 = vunpack.c.l.b16 %v2146
  %v2258 = vunpack.c.h.b16 %v2146
  %v2259 = vunpack.c.l.b16 %v2147
  %v2260 = vunpack.c.h.b16 %v2147
  %v2261 = vunpack.c.l.b16 %v2148
  %v2262 = vunpack.c.h.b16 %v2148
  %v2263 = vunpack.c.l.b16 %v2149
  %v2264 = vunpack.c.h.b16 %v2149
  %v2265 = vunpack.c.l.b16 %v2150
  %v2266 = vunpack.c.h.b16 %v2150
  %v2267 = vunpack.c.l.b16 %v2151
  %v2268 = vunpack.c.h.b16 %v2151
  %v2269 = vunpack.c.l.b16 %v2152
  %v2270 = vunpack.c.h.b16 %v2152
  %v2271 = vunpack.c.l.b16 %v2153
  %v2272 = vunpack.c.h.b16 %v2153
  %v2273 = vunpack.c.l.b16 %v2154
  %v2274 = vunpack.c.h.b16 %v2154
  %v2275 = vunpack.c.l.b16 %v2155
  %v2276 = vunpack.c.h.b16 %v2155
  %v2277 = vunpack.c.l.b16 %v2156
  %v2278 = vunpack.c.h.b16 %v2156
  %v2279 = vunpack.c.l.b16 %v2157
  %v2280 = vunpack.c.h.b16 %v2157
  %v2281 = vunpack.c.l.b16 %v2158
  %v2282 = vunpack.c.h.b16 %v2158
  %v2283 = vunpack.c.l.b16 %v2159
  %v2284 = vunpack.c.h.b16 %v2159
  %v2285 = vunpack.c.l.b16 %v2160
  %v2286 = vunpack.c.h.b16 %v2160
  %v2287 = vunpack.c.l.b16 %v2161
  %v2288 = vunpack.c.h.b16 %v2161
  %v2289 = vunpack.c.l.b16 %v2162
  %v2290 = vunpack.c.h.b16 %v2162
  %v2291 = vunpack.c.l.b16 %v2163
  %v2292 = vunpack.c.h.b16 %v2163
  %v2293 = vunpack.c.l.b16 %v2164
  %v2294 = vunpack.c.h.b16 %v2164
  %v2295 = vunpack.c.l.b16 %v2165
  %v2296 = vunpack.c.h.b16 %v2165
  %v2297 = vunpack.c.l.b16 %v2166
  %v2298 = vunpack.c.h.b16 %v2166
  %v2299 = vunpack.c.l.b16 %v2167
  %v2300 = vunpack.c.h.b16 %v2167
  %v2301 = vunpack.c.l.b16 %v2168
  %v2302 = vunpack.c.h.b16 %v2168
  %v2303 = vunpack.c.l.b16 %v2169
  %v2304 = vunpack.c.h.b16 %v2169
  %v2305 = vunpack.c.l.b16 %v2170
  %v2306 = vunpack.c.h.b16 %v2170
  %v2307 = vunpack.c.l.b16 %v2171
  %v2308 = vunpack.c.h.b16 %v2171
  %v2309 = vunpack.c.l.b16 %v2172
  %v2310 = vunpack.c.h.b16 %v2172
  %v2311 = vunpack.c.l.b16 %v2173
  %v2312 = vunpack.c.h.b16 %v2173
  %v2313 = vunpack.c.l.b16 %v2174
  %v2314 = vunpack.c.h.b16 %v2174
  %v2315 = vunpack.c.l.b16 %v2175
  %v2316 = vunpack.c.h.b16 %v2175
  %v2317 = vunpack.c.l.b16 %v2176
  %v2318 = vunpack.c.h.b16 %v2176
  %v2319 = vunpack.c.l.b16 %v2177
  %v2320 = vunpack.c.h.b16 %v2177
  %v2321 = vunpack.c.l.b16 %v2178
  %v2322 = vunpack.c.h.b16 %v2178
  %v2323 = vunpack.c.l.b16 %v2179
  %v2324 = vunpack.c.h.b16 %v2179
  %v2325 = vunpack.c.l.b16 %v2180
  %v2326 = vunpack.c.h.b16 %v2180
  %v2327 = vunpack.c.l.b16 %v2181
  %v2328 = vunpack.c.h.b16 %v2181
  %v2329 = vunpack.c.l.b16 %v2182
  %v2330 = vunpack.c.h.b16 %v2182
  %v2331 = vunpack.c.l.b16 %v2183
  %v2332 = vunpack.c.h.b16 %v2183
  %v2333 = vunpack.c.l.b16 %v2184
  %v2334 = vunpack.c.h.b16 %v2184
  %v2335 = vunpack.c.l.b16 %v2185
  %v2336 = vunpack.c.h.b16 %v2185
  %v2337 = vunpack.c.l.b16 %v2186
  %v2338 = vunpack.c.h.b16 %v2186
  %v2339 = vunpack.c.l.b16 %v2187
  %v2340 = vunpack.c.h.b16 %v2187
  %v2341 = vunpack.c.l.b16 %v2188
  %v2342 = vunpack.c.h.b16 %v2188
  %v2343 = vunpack.c.l.b16 %v2189
  %v2344 = vunpack.c.h.b16 %v2189
  %v2345 = vunpack.c.l.b16 %v2190
  %v2346 = vunpack.c.h.b16 %v2190
  %v2347 = vpack.c.b16 %v2253, %v2251
  %v2348 = vpack.c.b16 %v2254, %v2252
  %v2349 = vpack.c.b16 %v2257, %v2255
  %v2350 = vpack.c.b16 %v2258, %v2256
  %v2351 = vpack.c.b16 %v2261, %v2259
  %v2352 = vpack.c.b16 %v2262, %v2260
  %v2353 = vpack.c.b16 %v2265, %v2263
  %v2354 = vpack.c.b16 %v2266, %v2264
  %v2355 = vpack.c.b16 %v2269, %v2267
  %v2356 = vpack.c.b16 %v2270, %v2268
  %v2357 = vpack.c.b16 %v2273, %v2271
  %v2358 = vpack.c.b16 %v2274, %v2272
  %v2359 = vpack.c.b16 %v2277, %v2275
  %v2360 = vpack.c.b16 %v2278, %v2276
  %v2361 = vpack.c.b16 %v2281, %v2279
  %v2362 = vpack.c.b16 %v2282, %v2280
  %v2363 = vpack.c.b16 %v2285, %v2283
  %v2364 = vpack.c.b16 %v2286, %v2284
  %v2365 = vpack.c.b16 %v2289, %v2287
  %v2366 = vpack.c.b16 %v2290, %v2288
  %v2367 = vpack.c.b16 %v2293, %v2291
  %v2368 = vpack.c.b16 %v2294, %v2292
  %v2369 = vpack.c.b16 %v2297, %v2295
  %v2370 = vpack.c.b16 %v2298, %v2296
  %v2371 = vpack.c.b16 %v2301, %v2299
  %v2372 = vpack.c.b16 %v2302, %v2300
  %v2373 = vpack.c.b16 %v2305, %v2303
  %v2374 = vpack.c.b16 %v2306, %v2304
  %v2375 = vpack.c.b16 %v2309, %v2307
  %v2376 = vpack.c.b16 %v2310, %v2308
  %v2377 = vpack.c.b16 %v2313, %v2311
  %v2378 = vpack.c.b16 %v2314, %v2312
  %v2379 = vpack.c.b16 %v2317, %v2315
  %v2380 = vpack.c.b16 %v2318, %v2316
  %v2381 = vpack.c.b16 %v2321, %v2319
  %v2382 = vpack.c.b16 %v2322, %v2320
  %v2383 = vpack.c.b16 %v2325, %v2323
  %v2384 = vpack.c.b16 %v2326, %v2324
  %v2385 = vpack.c.b16 %v2329, %v2327
  %v2386 = vpack.c.b16 %v2330, %v2328
  %v2387 = vpack.c.b16 %v2333, %v2331
  %v2388 = vpack.c.b16 %v2334, %v2332
  %v2389 = vpack.c.b16 %v2337, %v2335
  %v2390 = vpack.c.b16 %v2338, %v2336
  %v2391 = vpack.c.b16 %v2341, %v2339
  %v2392 = vpack.c.b16 %v2342, %v2340
  %v2393 = vpack.c.b16 %v2345, %v2343
  %v2394 = vpack.c.b16 %v2346, %v2344
  %2443 = vmatprep.subr.bf16.mxu0 %v2348
  %2444 = vmatpush1.bf16.msra.mxu0 %v2347
  %2445 = vmatprep.subr.bf16.mxu0 %v2350
  %2446 = vmatpush1.bf16.msra.mxu0 %v2349
  %2447 = vmatprep.subr.bf16.mxu0 %v2352
  %2448 = vmatpush1.bf16.msra.mxu0 %v2351
  %2449 = vmatprep.subr.bf16.mxu0 %v2354
  %2450 = vmatpush1.bf16.msra.mxu0 %v2353
  %2451 = vmatprep.subr.bf16.mxu0 %v2356
  %2452 = vmatpush1.bf16.msra.mxu0 %v2355
  %2453 = vmatprep.subr.bf16.mxu0 %v2358
  %2454 = vmatpush1.bf16.msra.mxu0 %v2357
  %2455 = vmatprep.subr.bf16.mxu0 %v2360
  %2456 = vmatpush1.bf16.msra.mxu0 %v2359
  %2457 = vmatprep.subr.bf16.mxu0 %v2362
  %2458 = vmatpush1.bf16.msra.mxu0 %v2361
  %2459 = vmatprep.subr.bf16.mxu0 %v2364
  %2460 = vmatpush1.bf16.msra.mxu0 %v2363
  %2461 = vmatprep.subr.bf16.mxu0 %v2366
  %2462 = vmatpush1.bf16.msra.mxu0 %v2365
  %2463 = vmatprep.subr.bf16.mxu0 %v2368
  %2464 = vmatpush1.bf16.msra.mxu0 %v2367
  %2465 = vmatprep.subr.bf16.mxu0 %v2370
  %2466 = vmatpush1.bf16.msra.mxu0 %v2369
  %2467 = vmatprep.subr.bf16.mxu0 %v2372
  %2468 = vmatpush1.bf16.msra.mxu0 %v2371
  %2469 = vmatprep.subr.bf16.mxu0 %v2374
  %2470 = vmatpush1.bf16.msra.mxu0 %v2373
  %2471 = vmatprep.subr.bf16.mxu0 %v2376
  %2472 = vmatpush1.bf16.msra.mxu0 %v2375
  %2473 = vmatprep.subr.bf16.mxu0 %v2378
  %2474 = vmatpush1.bf16.msra.mxu0 %v2377
  %2475 = vmatprep.mubr.bf16.mxu0 %v2141
  %2476 = vmatmul.mubr.bf16.gmra.mrb[0].mxu0 %v2140
  %v2477 = vpop.f32.mrb[0].mxu0
  %v2478 = vadd.f32 %v2196, %v2477
  %v2479 = vpop.f32.mrb[0].mxu0
  %v2480 = vadd.f32 %v2200, %v2479
  %v2481 = vpop.f32.mrb[0].mxu0
  %v2482 = vpop.f32.mrb[0].mxu0
  %2483 = vdwg.mxu0
  %2484 = vmatprep.subr.bf16.mxu0 %v2380
  %2485 = vmatpush1.bf16.msra.mxu0 %v2379
  %2486 = vmatprep.subr.bf16.mxu0 %v2382
  %2487 = vmatpush1.bf16.msra.mxu0 %v2381
  %2488 = vmatprep.subr.bf16.mxu0 %v2384
  %2489 = vmatpush1.bf16.msra.mxu0 %v2383
  %2490 = vmatprep.subr.bf16.mxu0 %v2386
  %2491 = vmatpush1.bf16.msra.mxu0 %v2385
  %2492 = vmatprep.subr.bf16.mxu0 %v2388
  %2493 = vmatpush1.bf16.msra.mxu0 %v2387
  %2494 = vmatprep.subr.bf16.mxu0 %v2390
  %2495 = vmatpush1.bf16.msra.mxu0 %v2389
  %2496 = vmatprep.subr.bf16.mxu0 %v2392
  %2497 = vmatpush1.bf16.msra.mxu0 %v2391
  %2498 = vmatprep.subr.bf16.mxu0 %v2394
  %2499 = vmatpush1.bf16.msra.mxu0 %v2393
  %2500 = vmatprep.subr.bf16.mxu0 0
  %2501 = vmatpush1.bf16.msra.mxu0 0
  %2502 = vmatprep.subr.bf16.mxu0 0
  %2503 = vmatpush1.bf16.msra.mxu0 0
  %2504 = vmatprep.subr.bf16.mxu0 0
  %2505 = vmatpush1.bf16.msra.mxu0 0
  %2506 = vmatprep.subr.bf16.mxu0 0
  %2507 = vmatpush1.bf16.msra.mxu0 0
  %2508 = vmatprep.subr.bf16.mxu0 0
  %2509 = vmatpush1.bf16.msra.mxu0 0
  %2510 = vmatprep.subr.bf16.mxu0 0
  %2511 = vmatpush1.bf16.msra.mxu0 0
  %2512 = vmatprep.subr.bf16.mxu0 0
  %2513 = vmatpush1.bf16.msra.mxu0 0
  %2514 = vmatprep.subr.bf16.mxu0 0
  %2515 = vmatpush1.bf16.msra.mxu0 0
  %2516 = vmatprep.mubr.bf16.mxu0 0
  %2517 = vmatmul.mubr.bf16.gmra.mrb[0].mxu0 %v2142
  %v2518 = vpop.f32.mrb[0].mxu0
  %v2519 = vadd.f32 %v2478, %v2518
  %v2520 = vpop.f32.mrb[0].mxu0
  %v2521 = vadd.f32 %v2480, %v2520
  %v2522 = vpop.f32.mrb[0].mxu0
  %v2523 = vpop.f32.mrb[0].mxu0
  %2524 = vdwg.mxu0
  %v2525 = vmax.f32 %v2519, 0.0
  %v2526 = vmax.f32 %v2521, 0.0
  %v2527 = vpack.c.bf16 %v2525, %v2525
  %v2528 = vpack.c.bf16 %v2526, %v2526
  %v2529 = vld [vmem:[%s9] sm:$0xff]
  %v2530 = vld [vmem:[%s9 + $0x8] sm:$0xff]
  %v2531 = vld [vmem:[%s9 + $0x10] sm:$0xff]
  %v2532 = vld [vmem:[%s9 + $0x18] sm:$0xff]
  %v2533 = vld [vmem:[%s9 + $0x20] sm:$0xff]
  %v2534 = vld [vmem:[%s9 + $0x28] sm:$0xff]
  %v2535 = vld [vmem:[%s9 + $0x30] sm:$0xff]
  %v2536 = vld [vmem:[%s9 + $0x38] sm:$0xff]
  %v2537 = vld [vmem:[%s9 + $0x40] sm:$0xff]
  %v2538 = vld [vmem:[%s9 + $0x48] sm:$0xff]
  %v2539 = vld [vmem:[%s9 + $0x50] sm:$0xff]
  %v2540 = vld [vmem:[%s9 + $0x58] sm:$0xff]
  %v2541 = vld [vmem:[%s9 + $0x60] sm:$0xff]
  %v2542 = vld [vmem:[%s9 + $0x68] sm:$0xff]
  %v2543 = vld [vmem:[%s9 + $0x70] sm:$0xff]
  %v2544 = vld [vmem:[%s9 + $0x78] sm:$0xff]
  %v2545 = vld [vmem:[%s9 + $0x80] sm:$0xff]
  %v2546 = vld [vmem:[%s9 + $0x88] sm:$0xff]
  %v2547 = vld [vmem:[%s9 + $0x90] sm:$0xff]
  %v2548 = vld [vmem:[%s9 + $0x98] sm:$0xff]
  %v2549 = vld [vmem:[%s9 + $0xa0] sm:$0xff]
  %v2550 = vld [vmem:[%s9 + $0xa8] sm:$0xff]
  %v2551 = vld [vmem:[%s9 + $0xb0] sm:$0xff]
  %v2552 = vld [vmem:[%s9 + $0xb8] sm:$0xff]
  %v2553 = vld [vmem:[%s9 + $0xc0] sm:$0xff]
  %v2554 = vld [vmem:[%s9 + $0xc8] sm:$0xff]
  %v2555 = vld [vmem:[%s9 + $0xd0] sm:$0xff]
  %v2556 = vld [vmem:[%s9 + $0xd8] sm:$0xff]
  %v2557 = vld [vmem:[%s9 + $0xe0] sm:$0xff]
  %v2558 = vld [vmem:[%s9 + $0xe8] sm:$0xff]
  %v2559 = vld [vmem:[%s9 + $0xf0] sm:$0xff]
  %v2560 = vld [vmem:[%s9 + $0xf8] sm:$0xff]
  %v2561 = vld [vmem:[%s10] sm:$0x3]
  %v2563 = vlaneseq
  %v2564 = vshrl.u32 %v2563, 7
  %v2565 = vsub.s32 0, %v2564
  %v2566 = vrot.slane %v2561, %v2565
  %v2567 = vlaneseq
  %v2568 = vshrl.u32 %v2567, 7
  %v2569 = vsub.s32 1, %v2568
  %v2570 = vrot.slane %v2561, %v2569
  %v2605 = vunpack.c.l.b16 %v2529
  %v2606 = vunpack.c.h.b16 %v2529
  %v2607 = vunpack.c.l.b16 %v2530
  %v2608 = vunpack.c.h.b16 %v2530
  %v2609 = vunpack.c.l.b16 %v2531
  %v2610 = vunpack.c.h.b16 %v2531
  %v2611 = vunpack.c.l.b16 %v2532
  %v2612 = vunpack.c.h.b16 %v2532
  %v2613 = vunpack.c.l.b16 %v2533
  %v2614 = vunpack.c.h.b16 %v2533
  %v2615 = vunpack.c.l.b16 %v2534
  %v2616 = vunpack.c.h.b16 %v2534
  %v2617 = vunpack.c.l.b16 %v2535
  %v2618 = vunpack.c.h.b16 %v2535
  %v2619 = vunpack.c.l.b16 %v2536
  %v2620 = vunpack.c.h.b16 %v2536
  %v2621 = vunpack.c.l.b16 %v2537
  %v2622 = vunpack.c.h.b16 %v2537
  %v2623 = vunpack.c.l.b16 %v2538
  %v2624 = vunpack.c.h.b16 %v2538
  %v2625 = vunpack.c.l.b16 %v2539
  %v2626 = vunpack.c.h.b16 %v2539
  %v2627 = vunpack.c.l.b16 %v2540
  %v2628 = vunpack.c.h.b16 %v2540
  %v2629 = vunpack.c.l.b16 %v2541
  %v2630 = vunpack.c.h.b16 %v2541
  %v2631 = vunpack.c.l.b16 %v2542
  %v2632 = vunpack.c.h.b16 %v2542
  %v2633 = vunpack.c.l.b16 %v2543
  %v2634 = vunpack.c.h.b16 %v2543
  %v2635 = vunpack.c.l.b16 %v2544
  %v2636 = vunpack.c.h.b16 %v2544
  %v2637 = vunpack.c.l.b16 %v2545
  %v2638 = vunpack.c.h.b16 %v2545
  %v2639 = vunpack.c.l.b16 %v2546
  %v2640 = vunpack.c.h.b16 %v2546
  %v2641 = vunpack.c.l.b16 %v2547
  %v2642 = vunpack.c.h.b16 %v2547
  %v2643 = vunpack.c.l.b16 %v2548
  %v2644 = vunpack.c.h.b16 %v2548
  %v2645 = vunpack.c.l.b16 %v2549
  %v2646 = vunpack.c.h.b16 %v2549
  %v2647 = vunpack.c.l.b16 %v2550
  %v2648 = vunpack.c.h.b16 %v2550
  %v2649 = vunpack.c.l.b16 %v2551
  %v2650 = vunpack.c.h.b16 %v2551
  %v2651 = vunpack.c.l.b16 %v2552
  %v2652 = vunpack.c.h.b16 %v2552
  %v2653 = vunpack.c.l.b16 %v2553
  %v2654 = vunpack.c.h.b16 %v2553
  %v2655 = vunpack.c.l.b16 %v2554
  %v2656 = vunpack.c.h.b16 %v2554
  %v2657 = vunpack.c.l.b16 %v2555
  %v2658 = vunpack.c.h.b16 %v2555
  %v2659 = vunpack.c.l.b16 %v2556
  %v2660 = vunpack.c.h.b16 %v2556
  %v2661 = vunpack.c.l.b16 %v2557
  %v2662 = vunpack.c.h.b16 %v2557
  %v2663 = vunpack.c.l.b16 %v2558
  %v2664 = vunpack.c.h.b16 %v2558
  %v2665 = vunpack.c.l.b16 %v2559
  %v2666 = vunpack.c.h.b16 %v2559
  %v2667 = vunpack.c.l.b16 %v2560
  %v2668 = vunpack.c.h.b16 %v2560
  %v2669 = vpack.c.b16 %v2607, %v2605
  %v2670 = vpack.c.b16 %v2608, %v2606
  %v2671 = vpack.c.b16 %v2611, %v2609
  %v2672 = vpack.c.b16 %v2612, %v2610
  %v2673 = vpack.c.b16 %v2615, %v2613
  %v2674 = vpack.c.b16 %v2616, %v2614
  %v2675 = vpack.c.b16 %v2619, %v2617
  %v2676 = vpack.c.b16 %v2620, %v2618
  %v2677 = vpack.c.b16 %v2623, %v2621
  %v2678 = vpack.c.b16 %v2624, %v2622
  %v2679 = vpack.c.b16 %v2627, %v2625
  %v2680 = vpack.c.b16 %v2628, %v2626
  %v2681 = vpack.c.b16 %v2631, %v2629
  %v2682 = vpack.c.b16 %v2632, %v2630
  %v2683 = vpack.c.b16 %v2635, %v2633
  %v2684 = vpack.c.b16 %v2636, %v2634
  %v2685 = vpack.c.b16 %v2639, %v2637
  %v2686 = vpack.c.b16 %v2640, %v2638
  %v2687 = vpack.c.b16 %v2643, %v2641
  %v2688 = vpack.c.b16 %v2644, %v2642
  %v2689 = vpack.c.b16 %v2647, %v2645
  %v2690 = vpack.c.b16 %v2648, %v2646
  %v2691 = vpack.c.b16 %v2651, %v2649
  %v2692 = vpack.c.b16 %v2652, %v2650
  %v2693 = vpack.c.b16 %v2655, %v2653
  %v2694 = vpack.c.b16 %v2656, %v2654
  %v2695 = vpack.c.b16 %v2659, %v2657
  %v2696 = vpack.c.b16 %v2660, %v2658
  %v2697 = vpack.c.b16 %v2663, %v2661
  %v2698 = vpack.c.b16 %v2664, %v2662
  %v2699 = vpack.c.b16 %v2667, %v2665
  %v2700 = vpack.c.b16 %v2668, %v2666
  %2733 = vmatprep.subr.bf16.mxu0 %v2670
  %2734 = vmatpush1.bf16.msra.mxu0 %v2669
  %2735 = vmatprep.subr.bf16.mxu0 %v2672
  %2736 = vmatpush1.bf16.msra.mxu0 %v2671
  %2737 = vmatprep.subr.bf16.mxu0 %v2674
  %2738 = vmatpush1.bf16.msra.mxu0 %v2673
  %2739 = vmatprep.subr.bf16.mxu0 %v2676
  %2740 = vmatpush1.bf16.msra.mxu0 %v2675
  %2741 = vmatprep.subr.bf16.mxu0 %v2678
  %2742 = vmatpush1.bf16.msra.mxu0 %v2677
  %2743 = vmatprep.subr.bf16.mxu0 %v2680
  %2744 = vmatpush1.bf16.msra.mxu0 %v2679
  %2745 = vmatprep.subr.bf16.mxu0 %v2682
  %2746 = vmatpush1.bf16.msra.mxu0 %v2681
  %2747 = vmatprep.subr.bf16.mxu0 %v2684
  %2748 = vmatpush1.bf16.msra.mxu0 %v2683
  %2749 = vmatprep.subr.bf16.mxu0 %v2686
  %2750 = vmatpush1.bf16.msra.mxu0 %v2685
  %2751 = vmatprep.subr.bf16.mxu0 %v2688
  %2752 = vmatpush1.bf16.msra.mxu0 %v2687
  %2753 = vmatprep.subr.bf16.mxu0 %v2690
  %2754 = vmatpush1.bf16.msra.mxu0 %v2689
  %2755 = vmatprep.subr.bf16.mxu0 %v2692
  %2756 = vmatpush1.bf16.msra.mxu0 %v2691
  %2757 = vmatprep.subr.bf16.mxu0 %v2694
  %2758 = vmatpush1.bf16.msra.mxu0 %v2693
  %2759 = vmatprep.subr.bf16.mxu0 %v2696
  %2760 = vmatpush1.bf16.msra.mxu0 %v2695
  %2761 = vmatprep.subr.bf16.mxu0 %v2698
  %2762 = vmatpush1.bf16.msra.mxu0 %v2697
  %2763 = vmatprep.subr.bf16.mxu0 %v2700
  %2764 = vmatpush1.bf16.msra.mxu0 %v2699
  %2765 = vmatprep.mubr.bf16.mxu0 %v2528
  %2766 = vmatmul.mubr.bf16.gmra.mrb[0].mxu0 %v2527
  %v2767 = vpop.f32.mrb[0].mxu0
  %v2768 = vadd.f32 %v2566, %v2767
  %v2769 = vpop.f32.mrb[0].mxu0
  %v2770 = vadd.f32 %v2570, %v2769
  %v2771 = vpop.f32.mrb[0].mxu0
  %v2772 = vpop.f32.mrb[0].mxu0
  %2773 = vdwg.mxu0
  %v2774 = vmax.f32 %v2768, 0.0
  %v2775 = vmax.f32 %v2770, 0.0
  %v2776 = vpack.c.bf16 %v2774, %v2774
  %v2777 = vpack.c.bf16 %v2775, %v2775
  %v2778 = vld [vmem:[%s11] sm:$0xf]
  %v2779 = vld [vmem:[%s11 + $0x4] sm:$0xf]
  %v2780 = vld [vmem:[%s11 + $0x8] sm:$0xf]
  %v2781 = vld [vmem:[%s11 + $0xc] sm:$0xf]
  %v2782 = vld [vmem:[%s11 + $0x10] sm:$0xf]
  %v2783 = vld [vmem:[%s11 + $0x14] sm:$0xf]
  %v2784 = vld [vmem:[%s11 + $0x18] sm:$0xf]
  %v2785 = vld [vmem:[%s11 + $0x1c] sm:$0xf]
  %v2786 = vld [vmem:[%s11 + $0x20] sm:$0xf]
  %v2787 = vld [vmem:[%s11 + $0x24] sm:$0xf]
  %v2788 = vld [vmem:[%s11 + $0x28] sm:$0xf]
  %v2789 = vld [vmem:[%s11 + $0x2c] sm:$0xf]
  %v2790 = vld [vmem:[%s11 + $0x30] sm:$0xf]
  %v2791 = vld [vmem:[%s11 + $0x34] sm:$0xf]
  %v2792 = vld [vmem:[%s11 + $0x38] sm:$0xf]
  %v2793 = vld [vmem:[%s11 + $0x3c] sm:$0xf]
  %v2794 = vld [vmem:[%s11 + $0x40] sm:$0xf]
  %v2795 = vld [vmem:[%s11 + $0x44] sm:$0xf]
  %v2796 = vld [vmem:[%s11 + $0x48] sm:$0xf]
  %v2797 = vld [vmem:[%s11 + $0x4c] sm:$0xf]
  %v2798 = vld [vmem:[%s11 + $0x50] sm:$0xf]
  %v2799 = vld [vmem:[%s11 + $0x54] sm:$0xf]
  %v2800 = vld [vmem:[%s11 + $0x58] sm:$0xf]
  %v2801 = vld [vmem:[%s11 + $0x5c] sm:$0xf]
  %v2802 = vld [vmem:[%s11 + $0x60] sm:$0xf]
  %v2803 = vld [vmem:[%s11 + $0x64] sm:$0xf]
  %v2804 = vld [vmem:[%s11 + $0x68] sm:$0xf]
  %v2805 = vld [vmem:[%s11 + $0x6c] sm:$0xf]
  %v2806 = vld [vmem:[%s11 + $0x70] sm:$0xf]
  %v2807 = vld [vmem:[%s11 + $0x74] sm:$0xf]
  %v2808 = vld [vmem:[%s11 + $0x78] sm:$0xf]
  %v2809 = vld [vmem:[%s11 + $0x7c] sm:$0xf]
  %v2810 = vld [vmem:[%s12] sm:$0x1]
  %v2812 = vlaneseq
  %v2813 = vshrl.u32 %v2812, 7
  %v2814 = vsub.s32 0, %v2813
  %v2815 = vrot.slane %v2810, %v2814
  %v2849 = vunpack.c.l.b16 %v2778
  %v2850 = vunpack.c.l.b16 %v2779
  %v2851 = vunpack.c.l.b16 %v2780
  %v2852 = vunpack.c.l.b16 %v2781
  %v2853 = vunpack.c.l.b16 %v2782
  %v2854 = vunpack.c.l.b16 %v2783
  %v2855 = vunpack.c.l.b16 %v2784
  %v2856 = vunpack.c.l.b16 %v2785
  %v2857 = vunpack.c.l.b16 %v2786
  %v2858 = vunpack.c.l.b16 %v2787
  %v2859 = vunpack.c.l.b16 %v2788
  %v2860 = vunpack.c.l.b16 %v2789
  %v2861 = vunpack.c.l.b16 %v2790
  %v2862 = vunpack.c.l.b16 %v2791
  %v2863 = vunpack.c.l.b16 %v2792
  %v2864 = vunpack.c.l.b16 %v2793
  %v2865 = vunpack.c.l.b16 %v2794
  %v2866 = vunpack.c.l.b16 %v2795
  %v2867 = vunpack.c.l.b16 %v2796
  %v2868 = vunpack.c.l.b16 %v2797
  %v2869 = vunpack.c.l.b16 %v2798
  %v2870 = vunpack.c.l.b16 %v2799
  %v2871 = vunpack.c.l.b16 %v2800
  %v2872 = vunpack.c.l.b16 %v2801
  %v2873 = vunpack.c.l.b16 %v2802
  %v2874 = vunpack.c.l.b16 %v2803
  %v2875 = vunpack.c.l.b16 %v2804
  %v2876 = vunpack.c.l.b16 %v2805
  %v2877 = vunpack.c.l.b16 %v2806
  %v2878 = vunpack.c.l.b16 %v2807
  %v2879 = vunpack.c.l.b16 %v2808
  %v2880 = vunpack.c.l.b16 %v2809
  %v2881 = vpack.c.b16 %v2850, %v2849
  %v2882 = vpack.c.b16 %v2852, %v2851
  %v2883 = vpack.c.b16 %v2854, %v2853
  %v2884 = vpack.c.b16 %v2856, %v2855
  %v2885 = vpack.c.b16 %v2858, %v2857
  %v2886 = vpack.c.b16 %v2860, %v2859
  %v2887 = vpack.c.b16 %v2862, %v2861
  %v2888 = vpack.c.b16 %v2864, %v2863
  %v2889 = vpack.c.b16 %v2866, %v2865
  %v2890 = vpack.c.b16 %v2868, %v2867
  %v2891 = vpack.c.b16 %v2870, %v2869
  %v2892 = vpack.c.b16 %v2872, %v2871
  %v2893 = vpack.c.b16 %v2874, %v2873
  %v2894 = vpack.c.b16 %v2876, %v2875
  %v2895 = vpack.c.b16 %v2878, %v2877
  %v2896 = vpack.c.b16 %v2880, %v2879
  %2913 = vmatprep.subr.bf16.mxu0 0
  %2914 = vmatpush1.bf16.msra.mxu0 %v2881
  %2915 = vmatprep.subr.bf16.mxu0 0
  %2916 = vmatpush1.bf16.msra.mxu0 %v2882
  %2917 = vmatprep.subr.bf16.mxu0 0
  %2918 = vmatpush1.bf16.msra.mxu0 %v2883
  %2919 = vmatprep.subr.bf16.mxu0 0
  %2920 = vmatpush1.bf16.msra.mxu0 %v2884
  %2921 = vmatprep.subr.bf16.mxu0 0
  %2922 = vmatpush1.bf16.msra.mxu0 %v2885
  %2923 = vmatprep.subr.bf16.mxu0 0
  %2924 = vmatpush1.bf16.msra.mxu0 %v2886
  %2925 = vmatprep.subr.bf16.mxu0 0
  %2926 = vmatpush1.bf16.msra.mxu0 %v2887
  %2927 = vmatprep.subr.bf16.mxu0 0
  %2928 = vmatpush1.bf16.msra.mxu0 %v2888
  %2929 = vmatprep.subr.bf16.mxu0 0
  %2930 = vmatpush1.bf16.msra.mxu0 %v2889
  %2931 = vmatprep.subr.bf16.mxu0 0
  %2932 = vmatpush1.bf16.msra.mxu0 %v2890
  %2933 = vmatprep.subr.bf16.mxu0 0
  %2934 = vmatpush1.bf16.msra.mxu0 %v2891
  %2935 = vmatprep.subr.bf16.mxu0 0
  %2936 = vmatpush1.bf16.msra.mxu0 %v2892
  %2937 = vmatprep.subr.bf16.mxu0 0
  %2938 = vmatpush1.bf16.msra.mxu0 %v2893
  %2939 = vmatprep.subr.bf16.mxu0 0
  %2940 = vmatpush1.bf16.msra.mxu0 %v2894
  %2941 = vmatprep.subr.bf16.mxu0 0
  %2942 = vmatpush1.bf16.msra.mxu0 %v2895
  %2943 = vmatprep.subr.bf16.mxu0 0
  %2944 = vmatpush1.bf16.msra.mxu0 %v2896
  %2945 = vmatprep.mubr.bf16.mxu0 %v2777
  %2946 = vmatmul.mubr.bf16.gmra.mrb[0].mxu0 %v2776
  %v2947 = vpop.f32.mrb[0].mxu0
  %v2948 = vadd.f32 %v2815, %v2947
  %v2949 = vpop.f32.mrb[0].mxu0
  %v2950 = vpop.f32.mrb[0].mxu0
  %v2951 = vpop.f32.mrb[0].mxu0
  %2952 = vdwg.mxu0
  %v2953 = vmax.f32 %v2948, 0.0
  %v2954 = vpack.c.bf16 %v2953, %v2953
  %v2955 = vld [vmem:[%s13] sm:$0xf]
  %v2956 = vld [vmem:[%s13 + $0x4] sm:$0xf]
  %v2957 = vld [vmem:[%s13 + $0x8] sm:$0xf]
  %v2958 = vld [vmem:[%s13 + $0xc] sm:$0xf]
  %v2959 = vld [vmem:[%s13 + $0x10] sm:$0xf]
  %v2960 = vld [vmem:[%s13 + $0x14] sm:$0xf]
  %v2961 = vld [vmem:[%s13 + $0x18] sm:$0xf]
  %v2962 = vld [vmem:[%s13 + $0x1c] sm:$0xf]
  %v2963 = vld [vmem:[%s13 + $0x20] sm:$0xf]
  %v2964 = vld [vmem:[%s13 + $0x24] sm:$0xf]
  %v2965 = vld [vmem:[%s13 + $0x28] sm:$0xf]
  %v2966 = vld [vmem:[%s13 + $0x2c] sm:$0xf]
  %v2967 = vld [vmem:[%s13 + $0x30] sm:$0xf]
  %v2968 = vld [vmem:[%s13 + $0x34] sm:$0xf]
  %v2969 = vld [vmem:[%s13 + $0x38] sm:$0xf]
  %v2970 = vld [vmem:[%s13 + $0x3c] sm:$0xf]
  %v2971 = vld [vmem:[%s14] sm:$0x1]
  %v2973 = vlaneseq
  %v2974 = vshrl.u32 %v2973, 7
  %v2975 = vsub.s32 0, %v2974
  %v2976 = vrot.slane %v2971, %v2975
  %v2994 = vunpack.c.l.b16 %v2955
  %v2995 = vunpack.c.l.b16 %v2956
  %v2996 = vunpack.c.l.b16 %v2957
  %v2997 = vunpack.c.l.b16 %v2958
  %v2998 = vunpack.c.l.b16 %v2959
  %v2999 = vunpack.c.l.b16 %v2960
  %v3000 = vunpack.c.l.b16 %v2961
  %v3001 = vunpack.c.l.b16 %v2962
  %v3002 = vunpack.c.l.b16 %v2963
  %v3003 = vunpack.c.l.b16 %v2964
  %v3004 = vunpack.c.l.b16 %v2965
  %v3005 = vunpack.c.l.b16 %v2966
  %v3006 = vunpack.c.l.b16 %v2967
  %v3007 = vunpack.c.l.b16 %v2968
  %v3008 = vunpack.c.l.b16 %v2969
  %v3009 = vunpack.c.l.b16 %v2970
  %v3010 = vpack.c.b16 %v2995, %v2994
  %v3011 = vpack.c.b16 %v2997, %v2996
  %v3012 = vpack.c.b16 %v2999, %v2998
  %v3013 = vpack.c.b16 %v3001, %v3000
  %v3014 = vpack.c.b16 %v3003, %v3002
  %v3015 = vpack.c.b16 %v3005, %v3004
  %v3016 = vpack.c.b16 %v3007, %v3006
  %v3017 = vpack.c.b16 %v3009, %v3008
  %3026 = vmatprep.subr.bf16.mxu0 0
  %3027 = vmatpush1.bf16.msra.mxu0 %v3010
  %3028 = vmatprep.subr.bf16.mxu0 0
  %3029 = vmatpush1.bf16.msra.mxu0 %v3011
  %3030 = vmatprep.subr.bf16.mxu0 0
  %3031 = vmatpush1.bf16.msra.mxu0 %v3012
  %3032 = vmatprep.subr.bf16.mxu0 0
  %3033 = vmatpush1.bf16.msra.mxu0 %v3013
  %3034 = vmatprep.subr.bf16.mxu0 0
  %3035 = vmatpush1.bf16.msra.mxu0 %v3014
  %3036 = vmatprep.subr.bf16.mxu0 0
  %3037 = vmatpush1.bf16.msra.mxu0 %v3015
  %3038 = vmatprep.subr.bf16.mxu0 0
  %3039 = vmatpush1.bf16.msra.mxu0 %v3016
  %3040 = vmatprep.subr.bf16.mxu0 0
  %3041 = vmatpush1.bf16.msra.mxu0 %v3017
  %3042 = vmatprep.subr.bf16.mxu0 0
  %3043 = vmatpush1.bf16.msra.mxu0 0
  %3044 = vmatprep.subr.bf16.mxu0 0
  %3045 = vmatpush1.bf16.msra.mxu0 0
  %3046 = vmatprep.subr.bf16.mxu0 0
  %3047 = vmatpush1.bf16.msra.mxu0 0
  %3048 = vmatprep.subr.bf16.mxu0 0
  %3049 = vmatpush1.bf16.msra.mxu0 0
  %3050 = vmatprep.subr.bf16.mxu0 0
  %3051 = vmatpush1.bf16.msra.mxu0 0
  %3052 = vmatprep.subr.bf16.mxu0 0
  %3053 = vmatpush1.bf16.msra.mxu0 0
  %3054 = vmatprep.subr.bf16.mxu0 0
  %3055 = vmatpush1.bf16.msra.mxu0 0
  %3056 = vmatprep.subr.bf16.mxu0 0
  %3057 = vmatpush1.bf16.msra.mxu0 0
  %3058 = vmatprep.mubr.bf16.mxu0 0
  %3059 = vmatmul.mubr.bf16.gmra.mrb[0].mxu0 %v2954
  %v3060 = vpop.f32.mrb[0].mxu0
  %v3061 = vadd.f32 %v2976, %v3060
  %v3062 = vpop.f32.mrb[0].mxu0
  %v3063 = vpop.f32.mrb[0].mxu0
  %v3064 = vpop.f32.mrb[0].mxu0
  %3065 = vdwg.mxu0
  %v3066 = vlaneseq
  %v3067 = vand.u32 %v3066, 127
  %vm3068 = vcmp.lt.s32.totalorder %v3067, 4
  %v3069 = vsel %vm3068, %v3061, -inf
  %3070 = vmax.xlane.f32.xlu0 %v3069
  %v3071 = vpop.xlane.xlu0 %3070
  %v3072 = vsub.f32 %v3069, %v3071
  %v3073 = vmul.f32 %v3072, 1.442695
  %v3074 = vpow.pop %v3073
  %3075 = vadd.xlane.f32.xlu0 %v3074
  %v3076 = vpop.xlane.xlu0 %3075
  %v3077 = vrcp.pop %v3076
  %v3078 = vmul.f32 %v3074, %v3077
  %3079 = vst [vmem:[%s15] sm:$0xff] %v3078
  // Predicated region
  $region62: #{net_forward.1} parent=0 // pred_check
    _
  $region63: #{net_forward.1} parent=0 // pred_check_branch
    %3081 = sbr.rel (0) target = $region65
  $region64: #{net_forward.1} parent=0 // pred_region
    _
  $region65: #{net_forward.1} parent=0 // pred_fallthru
    _
  // Predicated region
  $region66: #{net_forward.1} parent=0 // pred_check
    _
  $region67: #{net_forward.1} parent=0 // pred_check_branch
    %3083 = sbr.rel (0) target = $region69
  $region68: #{net_forward.1} parent=0 // pred_region
    _
  $region69: #{net_forward.1} parent=0 // pred_fallthru
    _

</llo_original>
